<compile_context>
chip_gen: v7x
topology: tpu7x:2x2x1
jax: 0.10.0
libtpu: 0.0.40
codegen_flags: <defaults>
</compile_context>

<pallas_src>
import jax
import jax.numpy as jnp
from jax.experimental import pallas as pl
from jax.experimental.pallas import tpu as pltpu

IN_F = 28 * 28      # 784
IN_PAD = 896        # 7 * 128: lane-padded K for fc1
H1, H2, H3 = 512, 256, 128
OUT_F = 10
OUT_PAD = 128       # lane-dense final layer; cols OUT_F: hold zero weights


def _round_up(n, m):
    return ((n + m - 1) // m) * m


def simplenet_kernel(x_ref,
                     w1_ref, b1_ref,
                     w2_ref, b2_ref,
                     w3_ref, b3_ref,
                     w4_ref, b4_ref,
                     x1_ref, x2_ref, x3_ref, x4_ref):
    """Four fused linear (+ReLU) layers for one batch tile.

    Matmul operands are bf16 (MXU); accumulation, bias add and ReLU in f32.
    """
    x = x_ref[...]                                                  # (TB, 896) bf16

    h1 = jnp.dot(x, w1_ref[...],
                 preferred_element_type=jnp.float32) + b1_ref[...]
    h1 = jnp.maximum(h1, 0.0)
    x1_ref[...] = h1.astype(x1_ref.dtype)

    h2 = jnp.dot(h1.astype(jnp.bfloat16), w2_ref[...],
                 preferred_element_type=jnp.float32) + b2_ref[...]
    h2 = jnp.maximum(h2, 0.0)
    x2_ref[...] = h2.astype(x2_ref.dtype)

    h3 = jnp.dot(h2.astype(jnp.bfloat16), w3_ref[...],
                 preferred_element_type=jnp.float32) + b3_ref[...]
    h3 = jnp.maximum(h3, 0.0)
    x3_ref[...] = h3.astype(x3_ref.dtype)

    h4 = jnp.dot(h3.astype(jnp.bfloat16), w4_ref[...],
                 preferred_element_type=jnp.float32) + b4_ref[...]
    x4_ref[...] = h4                          # (TB, 128); lanes OUT_F: are zero


def simplenet_forward(x_nchw, params, *, tb=512, act_dtype=jnp.bfloat16):
    """x_nchw: (B, 1, 28, 28) float32.  Returns (x1, x2, x3, x4) like PyTorch.

    act_dtype is the storage dtype of x1..x3 (bf16 = what the next layer
    consumes, half the writeback; use jnp.float32 for the exact PyTorch output
    contract).  x4 is always f32.
    """
    B = x_nchw.shape[0]

    # --- batch-tile selection (16-row granularity keeps bf16 blocks legal) ---
    tb = max(16, min(tb, _round_up(B, 16)))      # don't pad tiny batches to a huge tile
    if B >= 32:
        # keep >= 2 grid steps so the "parallel" axis can use both v7x TensorCores
        tb = min(tb, _round_up(pl.cdiv(B, 2), 16))
    n_tiles = pl.cdiv(B, tb)
    Bp = n_tiles * tb

    # Single fused pad (batch + lane) + cast: one HBM pass over x under jit.
    x = jnp.pad(x_nchw.reshape(B, IN_F).astype(jnp.float32),
                ((0, Bp - B), (0, IN_PAD - IN_F))).astype(jnp.bfloat16)

    (w1, b1), (w2, b2), (w3, b3), (w4, b4) = params
    # Weights stored as (in, out): y = x @ W + b on the MXU; bf16 operands.
    w1p = jnp.pad(w1, ((0, IN_PAD - IN_F), (0, 0))).astype(jnp.bfloat16)
    w2p = w2.astype(jnp.bfloat16)
    w3p = w3.astype(jnp.bfloat16)
    w4p = jnp.pad(w4, ((0, 0), (0, OUT_PAD - OUT_F))).astype(jnp.bfloat16)
    b1p = b1.astype(jnp.float32)
    b2p = b2.astype(jnp.float32)
    b3p = b3.astype(jnp.float32)
    b4p = jnp.pad(b4.astype(jnp.float32), ((0, 0), (0, OUT_PAD - OUT_F)))

    def tile_spec(n):          # batch-tiled, default double-buffered
        return pl.BlockSpec((tb, n), lambda i: (i, 0))

    def resident(shape):       # constant index_map -> VMEM-resident, single buffer
        return pl.BlockSpec(shape, lambda i: (0, 0), pipeline_mode=pl.Buffered(1))

    act_bytes = jnp.dtype(act_dtype).itemsize
    flops = 2 * Bp * (IN_PAD * H1 + H1 * H2 + H2 * H3 + H3 * OUT_PAD)
    bytes_accessed = (
        2 * (IN_PAD * H1 + H1 * H2 + H2 * H3 + H3 * OUT_PAD)    # bf16 weights
        + 4 * (H1 + H2 + H3 + OUT_PAD)                          # f32 biases
        + 2 * Bp * IN_PAD                                       # bf16 input
        + act_bytes * Bp * (H1 + H2 + H3)                       # x1..x3 writeback
        + 4 * Bp * OUT_PAD)                                     # f32 x4 writeback

    out_shape = (
        jax.ShapeDtypeStruct((Bp, H1), act_dtype),
        jax.ShapeDtypeStruct((Bp, H2), act_dtype),
        jax.ShapeDtypeStruct((Bp, H3), act_dtype),
        jax.ShapeDtypeStruct((Bp, OUT_PAD), jnp.float32),
    )

    x1, x2, x3, x4 = pl.pallas_call(
        simplenet_kernel,
        out_shape=out_shape,
        grid=(n_tiles,),
        in_specs=[
            tile_spec(IN_PAD),
            resident((IN_PAD, H1)),  resident((1, H1)),
            resident((H1, H2)),      resident((1, H2)),
            resident((H2, H3)),      resident((1, H3)),
            resident((H3, OUT_PAD)), resident((1, OUT_PAD)),
        ],
        out_specs=(tile_spec(H1), tile_spec(H2), tile_spec(H3), tile_spec(OUT_PAD)),
        compiler_params=pltpu.CompilerParams(
            dimension_semantics=("parallel",),
            vmem_limit_bytes=32 * 1024 * 1024),
        cost_estimate=pl.CostEstimate(
            flops=flops, transcendentals=0, bytes_accessed=bytes_accessed),
    )(x, w1p, b1p, w2p, b2p, w3p, b3p, w4p, b4p)

    # Drop batch padding and lane padding.
    return x1[:B], x2[:B], x3[:B], x4[:B, :OUT_F]


def init_params(key):
    """Deterministic init mimicking nn.Linear's U(-1/sqrt(fan_in), 1/sqrt(fan_in))."""
    dims = [(IN_F, H1), (H1, H2), (H2, H3), (H3, OUT_F)]
    params = []
    for (fan_in, fan_out) in dims:
        key, kw, kb = jax.random.split(key, 3)
        bound = 1.0 / (fan_in ** 0.5)
        w = jax.random.uniform(kw, (fan_in, fan_out), jnp.float32, -bound, bound)
        b = jax.random.uniform(kb, (1, fan_out), jnp.float32, -bound, bound)
        params.append((w, b))
    return params


if __name__ == "__main__":
    key = jax.random.PRNGKey(0)
    key, kx = jax.random.split(key)

    B = 8
    x = jax.random.normal(kx, (B, 1, 28, 28), jnp.float32)   # NCHW, like PyTorch
    params = init_params(key)

    fwd = jax.jit(simplenet_forward)   # keeps pad/cast fused with the kernel call
    x1, x2, x3, x4 = fwd(x, params)
    jax.block_until_ready((x1, x2, x3, x4))

    xf = x.reshape(B, -1)

    # Tight check against a bf16-matched pure-JAX reference (same arithmetic).
    def dot_bf16(a, w):
        return jnp.dot(a.astype(jnp.bfloat16), w.astype(jnp.bfloat16),
                       preferred_element_type=jnp.float32)

    q1 = jnp.maximum(dot_bf16(xf, params[0][0]) + params[0][1], 0.0)
    q2 = jnp.maximum(dot_bf16(q1, params[1][0]) + params[1][1], 0.0)
    q3 = jnp.maximum(dot_bf16(q2, params[2][0]) + params[2][1], 0.0)
    q4 = dot_bf16(q3, params[3][0]) + params[3][1]
    for got, ref in zip((x1, x2, x3, x4), (q1, q2, q3, q4)):
        assert jnp.allclose(got.astype(jnp.float32), ref, atol=2e-2, rtol=2e-2), \
            "mismatch vs bf16 reference"

    # Loose sanity check against the full-f32 PyTorch-equivalent reference
    # (tolerance relaxed because the kernel uses bf16 matmul operands).
    r1 = jnp.maximum(xf @ params[0][0] + params[0][1], 0.0)
    r2 = jnp.maximum(r1 @ params[1][0] + params[1][1], 0.0)
    r3 = jnp.maximum(r2 @ params[2][0] + params[2][1], 0.0)
    r4 = r3 @ params[3][0] + params[3][1]
    for got, ref in zip((x1, x2, x3, x4), (r1, r2, r3, r4)):
        assert jnp.allclose(got.astype(jnp.float32), ref, atol=1e-1, rtol=1e-1), \
            "mismatch vs f32 reference"

    assert x1.shape == (B, 512) and x2.shape == (B, 256)
    assert x3.shape == (B, 128) and x4.shape == (B, 10)
    print("KERNEL_OK")
</pallas_src>

<mosaic_0001>
module attributes {stable_mosaic.version = 11 : i64} {
  func.func @simplenet_kernel(%arg0: i32, %arg1: memref<16x896xbf16, #tpu.memory_space<vmem>>, %arg2: memref<896x512xbf16, #tpu.memory_space<vmem>>, %arg3: memref<1x512xf32, #tpu.memory_space<vmem>>, %arg4: memref<512x256xbf16, #tpu.memory_space<vmem>>, %arg5: memref<1x256xf32, #tpu.memory_space<vmem>>, %arg6: memref<256x128xbf16, #tpu.memory_space<vmem>>, %arg7: memref<1x128xf32, #tpu.memory_space<vmem>>, %arg8: memref<128x128xbf16, #tpu.memory_space<vmem>>, %arg9: memref<1x128xf32, #tpu.memory_space<vmem>>, %arg10: memref<16x512xbf16, #tpu.memory_space<vmem>>, %arg11: memref<16x256xbf16, #tpu.memory_space<vmem>>, %arg12: memref<16x128xbf16, #tpu.memory_space<vmem>>, %arg13: memref<16x128xf32, #tpu.memory_space<vmem>>) attributes {dimension_semantics = [#tpu.dimension_semantics<parallel>], iteration_bounds = array<i64: 1>, scalar_prefetch = 0 : i64, scratch_operands = 0 : i64, tpu.core_type = #tpu.core_type<tc>, window_params = [{transform_indices = @transform_0, window_bounds = array<i64: 16, 896>}, {pipeline_mode = #tpu.pipeline_mode<synchronous>, transform_indices = @transform_1, window_bounds = array<i64: 896, 512>}, {pipeline_mode = #tpu.pipeline_mode<synchronous>, transform_indices = @transform_2, window_bounds = array<i64: 1, 512>}, {pipeline_mode = #tpu.pipeline_mode<synchronous>, transform_indices = @transform_3, window_bounds = array<i64: 512, 256>}, {pipeline_mode = #tpu.pipeline_mode<synchronous>, transform_indices = @transform_4, window_bounds = array<i64: 1, 256>}, {pipeline_mode = #tpu.pipeline_mode<synchronous>, transform_indices = @transform_5, window_bounds = array<i64: 256, 128>}, {pipeline_mode = #tpu.pipeline_mode<synchronous>, transform_indices = @transform_6, window_bounds = array<i64: 1, 128>}, {pipeline_mode = #tpu.pipeline_mode<synchronous>, transform_indices = @transform_7, window_bounds = array<i64: 128, 128>}, {pipeline_mode = #tpu.pipeline_mode<synchronous>, transform_indices = @transform_8, window_bounds = array<i64: 1, 128>}, {transform_indices = @transform_9, window_bounds = array<i64: 16, 512>}, {transform_indices = @transform_10, window_bounds = array<i64: 16, 256>}, {transform_indices = @transform_11, window_bounds = array<i64: 16, 128>}, {transform_indices = @transform_12, window_bounds = array<i64: 16, 128>}]} {
    %c0 = arith.constant 0 : index
    %c0_0 = arith.constant 0 : index
    %0 = vector.load %arg1[%c0, %c0_0] : memref<16x896xbf16, #tpu.memory_space<vmem>>, vector<16x896xbf16>
    %c0_1 = arith.constant 0 : index
    %c0_2 = arith.constant 0 : index
    %1 = vector.load %arg2[%c0_1, %c0_2] : memref<896x512xbf16, #tpu.memory_space<vmem>>, vector<896x512xbf16>
    %cst = arith.constant dense<0.000000e+00> : vector<16x512xf32>
    %2 = tpu.matmul %0, %1, %cst {dimension_numbers = #tpu.dot_dimension_numbers<[1], [0], [0], [1], [0, 0, 1, 1], [], []>} : vector<16x896xbf16>, vector<896x512xbf16>, vector<16x512xf32> -> vector<16x512xf32>
    %c0_3 = arith.constant 0 : index
    %c0_4 = arith.constant 0 : index
    %3 = vector.load %arg3[%c0_3, %c0_4] : memref<1x512xf32, #tpu.memory_space<vmem>>, vector<1x512xf32>
    %4 = vector.broadcast %3 : vector<1x512xf32> to vector<16x512xf32>
    %5 = arith.addf %2, %4 : vector<16x512xf32>
    %cst_5 = arith.constant 0.000000e+00 : f32
    %6 = vector.broadcast %cst_5 : f32 to vector<16x512xf32>
    %7 = arith.maximumf %5, %6 : vector<16x512xf32>
    %8 = arith.truncf %7 : vector<16x512xf32> to vector<16x512xbf16>
    %c0_6 = arith.constant 0 : index
    %c0_7 = arith.constant 0 : index
    %9 = vector.load %arg10[%c0_6, %c0_7] : memref<16x512xbf16, #tpu.memory_space<vmem>>, vector<16x512xbf16>
    tpu.vector_store %arg10[%c0_6, %c0_7], %8 {strides = array<i32>} : memref<16x512xbf16, #tpu.memory_space<vmem>>, vector<16x512xbf16>,
    %10 = arith.truncf %7 : vector<16x512xf32> to vector<16x512xbf16>
    %c0_8 = arith.constant 0 : index
    %c0_9 = arith.constant 0 : index
    %11 = vector.load %arg4[%c0_8, %c0_9] : memref<512x256xbf16, #tpu.memory_space<vmem>>, vector<512x256xbf16>
    %cst_10 = arith.constant dense<0.000000e+00> : vector<16x256xf32>
    %12 = tpu.matmul %10, %11, %cst_10 {dimension_numbers = #tpu.dot_dimension_numbers<[1], [0], [0], [1], [0, 0, 1, 1], [], []>} : vector<16x512xbf16>, vector<512x256xbf16>, vector<16x256xf32> -> vector<16x256xf32>
    %c0_11 = arith.constant 0 : index
    %c0_12 = arith.constant 0 : index
    %13 = vector.load %arg5[%c0_11, %c0_12] : memref<1x256xf32, #tpu.memory_space<vmem>>, vector<1x256xf32>
    %14 = vector.broadcast %13 : vector<1x256xf32> to vector<16x256xf32>
    %15 = arith.addf %12, %14 : vector<16x256xf32>
    %cst_13 = arith.constant 0.000000e+00 : f32
    %16 = vector.broadcast %cst_13 : f32 to vector<16x256xf32>
    %17 = arith.maximumf %15, %16 : vector<16x256xf32>
    %18 = arith.truncf %17 : vector<16x256xf32> to vector<16x256xbf16>
    %c0_14 = arith.constant 0 : index
    %c0_15 = arith.constant 0 : index
    %19 = vector.load %arg11[%c0_14, %c0_15] : memref<16x256xbf16, #tpu.memory_space<vmem>>, vector<16x256xbf16>
    tpu.vector_store %arg11[%c0_14, %c0_15], %18 {strides = array<i32>} : memref<16x256xbf16, #tpu.memory_space<vmem>>, vector<16x256xbf16>,
    %20 = arith.truncf %17 : vector<16x256xf32> to vector<16x256xbf16>
    %c0_16 = arith.constant 0 : index
    %c0_17 = arith.constant 0 : index
    %21 = vector.load %arg6[%c0_16, %c0_17] : memref<256x128xbf16, #tpu.memory_space<vmem>>, vector<256x128xbf16>
    %cst_18 = arith.constant dense<0.000000e+00> : vector<16x128xf32>
    %22 = tpu.matmul %20, %21, %cst_18 {dimension_numbers = #tpu.dot_dimension_numbers<[1], [0], [0], [1], [0, 0, 1, 1], [], []>} : vector<16x256xbf16>, vector<256x128xbf16>, vector<16x128xf32> -> vector<16x128xf32>
    %c0_19 = arith.constant 0 : index
    %c0_20 = arith.constant 0 : index
    %23 = vector.load %arg7[%c0_19, %c0_20] : memref<1x128xf32, #tpu.memory_space<vmem>>, vector<1x128xf32>
    %24 = vector.broadcast %23 : vector<1x128xf32> to vector<16x128xf32>
    %25 = arith.addf %22, %24 : vector<16x128xf32>
    %cst_21 = arith.constant 0.000000e+00 : f32
    %26 = vector.broadcast %cst_21 : f32 to vector<16x128xf32>
    %27 = arith.maximumf %25, %26 : vector<16x128xf32>
    %28 = arith.truncf %27 : vector<16x128xf32> to vector<16x128xbf16>
    %c0_22 = arith.constant 0 : index
    %c0_23 = arith.constant 0 : index
    %29 = vector.load %arg12[%c0_22, %c0_23] : memref<16x128xbf16, #tpu.memory_space<vmem>>, vector<16x128xbf16>
    tpu.vector_store %arg12[%c0_22, %c0_23], %28 {strides = array<i32>} : memref<16x128xbf16, #tpu.memory_space<vmem>>, vector<16x128xbf16>,
    %30 = arith.truncf %27 : vector<16x128xf32> to vector<16x128xbf16>
    %c0_24 = arith.constant 0 : index
    %c0_25 = arith.constant 0 : index
    %31 = vector.load %arg8[%c0_24, %c0_25] : memref<128x128xbf16, #tpu.memory_space<vmem>>, vector<128x128xbf16>
    %cst_26 = arith.constant dense<0.000000e+00> : vector<16x128xf32>
    %32 = tpu.matmul %30, %31, %cst_26 {dimension_numbers = #tpu.dot_dimension_numbers<[1], [0], [0], [1], [0, 0, 1, 1], [], []>} : vector<16x128xbf16>, vector<128x128xbf16>, vector<16x128xf32> -> vector<16x128xf32>
    %c0_27 = arith.constant 0 : index
    %c0_28 = arith.constant 0 : index
    %33 = vector.load %arg9[%c0_27, %c0_28] : memref<1x128xf32, #tpu.memory_space<vmem>>, vector<1x128xf32>
    %34 = vector.broadcast %33 : vector<1x128xf32> to vector<16x128xf32>
    %35 = arith.addf %32, %34 : vector<16x128xf32>
    %c0_29 = arith.constant 0 : index
    %c0_30 = arith.constant 0 : index
    %36 = vector.load %arg13[%c0_29, %c0_30] : memref<16x128xf32, #tpu.memory_space<vmem>>, vector<16x128xf32>
    tpu.vector_store %arg13[%c0_29, %c0_30], %35 {strides = array<i32>} : memref<16x128xf32, #tpu.memory_space<vmem>>, vector<16x128xf32>,
    return
  }
  func.func @transform_0(%arg0: i32) -> (i32, i32) {
    %c0_i32 = arith.constant 0 : i32
    %c0_i32_0 = arith.constant 0 : i32
    return %arg0, %c0_i32 : i32, i32
  }
  func.func @transform_1(%arg0: i32) -> (i32, i32) {
    %c0_i32 = arith.constant 0 : i32
    %c0_i32_0 = arith.constant 0 : i32
    %c0_i32_1 = arith.constant 0 : i32
    return %c0_i32, %c0_i32_0 : i32, i32
  }
  func.func @transform_2(%arg0: i32) -> (i32, i32) {
    %c0_i32 = arith.constant 0 : i32
    %c0_i32_0 = arith.constant 0 : i32
    %c0_i32_1 = arith.constant 0 : i32
    return %c0_i32, %c0_i32_0 : i32, i32
  }
  func.func @transform_3(%arg0: i32) -> (i32, i32) {
    %c0_i32 = arith.constant 0 : i32
    %c0_i32_0 = arith.constant 0 : i32
    %c0_i32_1 = arith.constant 0 : i32
    return %c0_i32, %c0_i32_0 : i32, i32
  }
  func.func @transform_4(%arg0: i32) -> (i32, i32) {
    %c0_i32 = arith.constant 0 : i32
    %c0_i32_0 = arith.constant 0 : i32
    %c0_i32_1 = arith.constant 0 : i32
    return %c0_i32, %c0_i32_0 : i32, i32
  }
  func.func @transform_5(%arg0: i32) -> (i32, i32) {
    %c0_i32 = arith.constant 0 : i32
    %c0_i32_0 = arith.constant 0 : i32
    %c0_i32_1 = arith.constant 0 : i32
    return %c0_i32, %c0_i32_0 : i32, i32
  }
  func.func @transform_6(%arg0: i32) -> (i32, i32) {
    %c0_i32 = arith.constant 0 : i32
    %c0_i32_0 = arith.constant 0 : i32
    %c0_i32_1 = arith.constant 0 : i32
    return %c0_i32, %c0_i32_0 : i32, i32
  }
  func.func @transform_7(%arg0: i32) -> (i32, i32) {
    %c0_i32 = arith.constant 0 : i32
    %c0_i32_0 = arith.constant 0 : i32
    %c0_i32_1 = arith.constant 0 : i32
    return %c0_i32, %c0_i32_0 : i32, i32
  }
  func.func @transform_8(%arg0: i32) -> (i32, i32) {
    %c0_i32 = arith.constant 0 : i32
    %c0_i32_0 = arith.constant 0 : i32
    %c0_i32_1 = arith.constant 0 : i32
    return %c0_i32, %c0_i32_0 : i32, i32
  }
  func.func @transform_9(%arg0: i32) -> (i32, i32) {
    %c0_i32 = arith.constant 0 : i32
    %c0_i32_0 = arith.constant 0 : i32
    return %arg0, %c0_i32 : i32, i32
  }
  func.func @transform_10(%arg0: i32) -> (i32, i32) {
    %c0_i32 = arith.constant 0 : i32
    %c0_i32_0 = arith.constant 0 : i32
    return %arg0, %c0_i32 : i32, i32
  }
  func.func @transform_11(%arg0: i32) -> (i32, i32) {
    %c0_i32 = arith.constant 0 : i32
    %c0_i32_0 = arith.constant 0 : i32
    return %arg0, %c0_i32 : i32, i32
  }
  func.func @transform_12(%arg0: i32) -> (i32, i32) {
    %c0_i32 = arith.constant 0 : i32
    %c0_i32_0 = arith.constant 0 : i32
    return %arg0, %c0_i32 : i32, i32
  }
}

</mosaic_0001>

<llo_original>
// kernel: simplenet_forward.1
$region0: #{simplenet_forward.1}
  #allocation0 [shape = 'u32[]', space=smem, size = 0x4, offset = 0x4, fixed_abs, tag = 'smem constant byte address 0x4 - core index']
  #allocation1 [shape = 'u32[144,128]{1,0:T(1,128)}', space=vmem, size = 0x12000, scoped, tag = 'internal scratch']
  %s0 = inlined_call_operand.vmem [shape: bf16[16,896], index: 0, kind: input, shape index: {}]
  %s1 = inlined_call_operand.vmem [shape: bf16[896,512], index: 1, kind: input, shape index: {}]
  %s2 = inlined_call_operand.vmem [shape: f32[1,512], index: 2, kind: input, shape index: {}]
  %s3 = inlined_call_operand.vmem [shape: bf16[512,256], index: 3, kind: input, shape index: {}]
  %s4 = inlined_call_operand.vmem [shape: f32[1,256], index: 4, kind: input, shape index: {}]
  %s5 = inlined_call_operand.vmem [shape: bf16[256,128], index: 5, kind: input, shape index: {}]
  %s6 = inlined_call_operand.vmem [shape: f32[1,128], index: 6, kind: input, shape index: {}]
  %s7 = inlined_call_operand.vmem [shape: bf16[128,128], index: 7, kind: input, shape index: {}]
  %s8 = inlined_call_operand.vmem [shape: f32[1,128], index: 8, kind: input, shape index: {}]
  %s9 = inlined_call_operand.vmem [shape: bf16[16,512], index: 9, kind: output, shape index: {0}]
  %s10 = inlined_call_operand.vmem [shape: bf16[16,256], index: 10, kind: output, shape index: {1}]
  %s11 = inlined_call_operand.vmem [shape: bf16[16,128], index: 11, kind: output, shape index: {2}]
  %s12 = inlined_call_operand.vmem [shape: f32[16,128], index: 12, kind: output, shape index: {3}]
  %13 = xla_tuple %s9, %s10, %s11, %s12
  %s14 = sld [smem:[#allocation0]]
  $region70: #{simplenet_forward.1} parent=0
    _
  %s16 = ssub.s32 1, %s14
  %s17 = scalar_select 0, %s16, %s14
  // Predicated region
  $region2: #{simplenet_forward.1} parent=0 // pred_check
    _
  $region3: #{simplenet_forward.1} parent=0 // pred_check_branch
    %19 = sbr.rel (0) target = $region5
  $region4: #{simplenet_forward.1} parent=0 // pred_region
    _
  $region5: #{simplenet_forward.1} parent=0 // pred_fallthru
    _
  // Predicated region
  $region6: #{simplenet_forward.1} parent=0 // pred_check
    _
  $region7: #{simplenet_forward.1} parent=0 // pred_check_branch
    %21 = sbr.rel (0) target = $region9
  $region8: #{simplenet_forward.1} parent=0 // pred_region
    _
  $region9: #{simplenet_forward.1} parent=0 // pred_fallthru
    _
  // Predicated region
  $region10: #{simplenet_forward.1} parent=0 // pred_check
    _
  $region11: #{simplenet_forward.1} parent=0 // pred_check_branch
    %23 = sbr.rel (0) target = $region13
  $region12: #{simplenet_forward.1} parent=0 // pred_region
    _
  $region13: #{simplenet_forward.1} parent=0 // pred_fallthru
    _
  // Predicated region
  $region14: #{simplenet_forward.1} parent=0 // pred_check
    _
  $region15: #{simplenet_forward.1} parent=0 // pred_check_branch
    %25 = sbr.rel (0) target = $region17
  $region16: #{simplenet_forward.1} parent=0 // pred_region
    _
  $region17: #{simplenet_forward.1} parent=0 // pred_fallthru
    _
  // Predicated region
  $region18: #{simplenet_forward.1} parent=0 // pred_check
    _
  $region19: #{simplenet_forward.1} parent=0 // pred_check_branch
    %27 = sbr.rel (0) target = $region21
  $region20: #{simplenet_forward.1} parent=0 // pred_region
    _
  $region21: #{simplenet_forward.1} parent=0 // pred_fallthru
    _
  // Predicated region
  $region22: #{simplenet_forward.1} parent=0 // pred_check
    _
  $region23: #{simplenet_forward.1} parent=0 // pred_check_branch
    %29 = sbr.rel (0) target = $region25
  $region24: #{simplenet_forward.1} parent=0 // pred_region
    _
  $region25: #{simplenet_forward.1} parent=0 // pred_fallthru
    _
  // Predicated region
  $region26: #{simplenet_forward.1} parent=0 // pred_check
    _
  $region27: #{simplenet_forward.1} parent=0 // pred_check_branch
    %31 = sbr.rel (0) target = $region29
  $region28: #{simplenet_forward.1} parent=0 // pred_region
    _
  $region29: #{simplenet_forward.1} parent=0 // pred_fallthru
    _
  // Predicated region
  $region30: #{simplenet_forward.1} parent=0 // pred_check
    _
  $region31: #{simplenet_forward.1} parent=0 // pred_check_branch
    %33 = sbr.rel (0) target = $region33
  $region32: #{simplenet_forward.1} parent=0 // pred_region
    _
  $region33: #{simplenet_forward.1} parent=0 // pred_fallthru
    _
  // Predicated region
  $region34: #{simplenet_forward.1} parent=0 // pred_check
    _
  $region35: #{simplenet_forward.1} parent=0 // pred_check_branch
    %35 = sbr.rel (0) target = $region37
  $region36: #{simplenet_forward.1} parent=0 // pred_region
    _
  $region37: #{simplenet_forward.1} parent=0 // pred_fallthru
    _
  %v37 = vld [vmem:[%s0] sm:$0xff]
  %v38 = vld [vmem:[%s0 + $0x8] sm:$0xff]
  %v39 = vld [vmem:[%s0 + $0x10] sm:$0xff]
  %v40 = vld [vmem:[%s0 + $0x18] sm:$0xf]
  %v41 = vld [vmem:[%s0 + $0x1c] sm:$0xff]
  %v42 = vld [vmem:[%s0 + $0x24] sm:$0xff]
  %v43 = vld [vmem:[%s0 + $0x2c] sm:$0xff]
  %v44 = vld [vmem:[%s0 + $0x34] sm:$0xf]
  %v45 = vld [vmem:[%s1] sm:$0xff]
  %v46 = vld [vmem:[%s1 + $0x8] sm:$0xff]
  %v47 = vld [vmem:[%s1 + $0x10] sm:$0xff]
  %v48 = vld [vmem:[%s1 + $0x18] sm:$0xff]
  %v49 = vld [vmem:[%s1 + $0x20] sm:$0xff]
  %v50 = vld [vmem:[%s1 + $0x28] sm:$0xff]
  %v51 = vld [vmem:[%s1 + $0x30] sm:$0xff]
  %v52 = vld [vmem:[%s1 + $0x38] sm:$0xff]
  %v53 = vld [vmem:[%s1 + $0x40] sm:$0xff]
  %v54 = vld [vmem:[%s1 + $0x48] sm:$0xff]
  %v55 = vld [vmem:[%s1 + $0x50] sm:$0xff]
  %v56 = vld [vmem:[%s1 + $0x58] sm:$0xff]
  %v57 = vld [vmem:[%s1 + $0x60] sm:$0xff]
  %v58 = vld [vmem:[%s1 + $0x68] sm:$0xff]
  %v59 = vld [vmem:[%s1 + $0x70] sm:$0xff]
  %v60 = vld [vmem:[%s1 + $0x78] sm:$0xff]
  %v61 = vld [vmem:[%s1 + $0x80] sm:$0xff]
  %v62 = vld [vmem:[%s1 + $0x88] sm:$0xff]
  %v63 = vld [vmem:[%s1 + $0x90] sm:$0xff]
  %v64 = vld [vmem:[%s1 + $0x98] sm:$0xff]
  %v65 = vld [vmem:[%s1 + $0xa0] sm:$0xff]
  %v66 = vld [vmem:[%s1 + $0xa8] sm:$0xff]
  %v67 = vld [vmem:[%s1 + $0xb0] sm:$0xff]
  %v68 = vld [vmem:[%s1 + $0xb8] sm:$0xff]
  %v69 = vld [vmem:[%s1 + $0xc0] sm:$0xff]
  %v70 = vld [vmem:[%s1 + $0xc8] sm:$0xff]
  %v71 = vld [vmem:[%s1 + $0xd0] sm:$0xff]
  %v72 = vld [vmem:[%s1 + $0xd8] sm:$0xff]
  %v73 = vld [vmem:[%s1 + $0xe0] sm:$0xff]
  %v74 = vld [vmem:[%s1 + $0xe8] sm:$0xff]
  %v75 = vld [vmem:[%s1 + $0xf0] sm:$0xff]
  %v76 = vld [vmem:[%s1 + $0xf8] sm:$0xff]
  %v77 = vld [vmem:[%s1 + $0x100] sm:$0xff]
  %v78 = vld [vmem:[%s1 + $0x108] sm:$0xff]
  %v79 = vld [vmem:[%s1 + $0x110] sm:$0xff]
  %v80 = vld [vmem:[%s1 + $0x118] sm:$0xff]
  %v81 = vld [vmem:[%s1 + $0x120] sm:$0xff]
  %v82 = vld [vmem:[%s1 + $0x128] sm:$0xff]
  %v83 = vld [vmem:[%s1 + $0x130] sm:$0xff]
  %v84 = vld [vmem:[%s1 + $0x138] sm:$0xff]
  %v85 = vld [vmem:[%s1 + $0x140] sm:$0xff]
  %v86 = vld [vmem:[%s1 + $0x148] sm:$0xff]
  %v87 = vld [vmem:[%s1 + $0x150] sm:$0xff]
  %v88 = vld [vmem:[%s1 + $0x158] sm:$0xff]
  %v89 = vld [vmem:[%s1 + $0x160] sm:$0xff]
  %v90 = vld [vmem:[%s1 + $0x168] sm:$0xff]
  %v91 = vld [vmem:[%s1 + $0x170] sm:$0xff]
  %v92 = vld [vmem:[%s1 + $0x178] sm:$0xff]
  %v93 = vld [vmem:[%s1 + $0x180] sm:$0xff]
  %v94 = vld [vmem:[%s1 + $0x188] sm:$0xff]
  %v95 = vld [vmem:[%s1 + $0x190] sm:$0xff]
  %v96 = vld [vmem:[%s1 + $0x198] sm:$0xff]
  %v97 = vld [vmem:[%s1 + $0x1a0] sm:$0xff]
  %v98 = vld [vmem:[%s1 + $0x1a8] sm:$0xff]
  %v99 = vld [vmem:[%s1 + $0x1b0] sm:$0xff]
  %v100 = vld [vmem:[%s1 + $0x1b8] sm:$0xff]
  %v101 = vld [vmem:[%s1 + $0x1c0] sm:$0xff]
  %v102 = vld [vmem:[%s1 + $0x1c8] sm:$0xff]
  %v103 = vld [vmem:[%s1 + $0x1d0] sm:$0xff]
  %v104 = vld [vmem:[%s1 + $0x1d8] sm:$0xff]
  %v105 = vld [vmem:[%s1 + $0x1e0] sm:$0xff]
  %v106 = vld [vmem:[%s1 + $0x1e8] sm:$0xff]
  %v107 = vld [vmem:[%s1 + $0x1f0] sm:$0xff]
  %v108 = vld [vmem:[%s1 + $0x1f8] sm:$0xff]
  %v109 = vld [vmem:[%s1 + $0x200] sm:$0xff]
  %v110 = vld [vmem:[%s1 + $0x208] sm:$0xff]
  %v111 = vld [vmem:[%s1 + $0x210] sm:$0xff]
  %v112 = vld [vmem:[%s1 + $0x218] sm:$0xff]
  %v113 = vld [vmem:[%s1 + $0x220] sm:$0xff]
  %v114 = vld [vmem:[%s1 + $0x228] sm:$0xff]
  %v115 = vld [vmem:[%s1 + $0x230] sm:$0xff]
  %v116 = vld [vmem:[%s1 + $0x238] sm:$0xff]
  %v117 = vld [vmem:[%s1 + $0x240] sm:$0xff]
  %v118 = vld [vmem:[%s1 + $0x248] sm:$0xff]
  %v119 = vld [vmem:[%s1 + $0x250] sm:$0xff]
  %v120 = vld [vmem:[%s1 + $0x258] sm:$0xff]
  %v121 = vld [vmem:[%s1 + $0x260] sm:$0xff]
  %v122 = vld [vmem:[%s1 + $0x268] sm:$0xff]
  %v123 = vld [vmem:[%s1 + $0x270] sm:$0xff]
  %v124 = vld [vmem:[%s1 + $0x278] sm:$0xff]
  %v125 = vld [vmem:[%s1 + $0x280] sm:$0xff]
  %v126 = vld [vmem:[%s1 + $0x288] sm:$0xff]
  %v127 = vld [vmem:[%s1 + $0x290] sm:$0xff]
  %v128 = vld [vmem:[%s1 + $0x298] sm:$0xff]
  %v129 = vld [vmem:[%s1 + $0x2a0] sm:$0xff]
  %v130 = vld [vmem:[%s1 + $0x2a8] sm:$0xff]
  %v131 = vld [vmem:[%s1 + $0x2b0] sm:$0xff]
  %v132 = vld [vmem:[%s1 + $0x2b8] sm:$0xff]
  %v133 = vld [vmem:[%s1 + $0x2c0] sm:$0xff]
  %v134 = vld [vmem:[%s1 + $0x2c8] sm:$0xff]
  %v135 = vld [vmem:[%s1 + $0x2d0] sm:$0xff]
  %v136 = vld [vmem:[%s1 + $0x2d8] sm:$0xff]
  %v137 = vld [vmem:[%s1 + $0x2e0] sm:$0xff]
  %v138 = vld [vmem:[%s1 + $0x2e8] sm:$0xff]
  %v139 = vld [vmem:[%s1 + $0x2f0] sm:$0xff]
  %v140 = vld [vmem:[%s1 + $0x2f8] sm:$0xff]
  %v141 = vld [vmem:[%s1 + $0x300] sm:$0xff]
  %v142 = vld [vmem:[%s1 + $0x308] sm:$0xff]
  %v143 = vld [vmem:[%s1 + $0x310] sm:$0xff]
  %v144 = vld [vmem:[%s1 + $0x318] sm:$0xff]
  %v145 = vld [vmem:[%s1 + $0x320] sm:$0xff]
  %v146 = vld [vmem:[%s1 + $0x328] sm:$0xff]
  %v147 = vld [vmem:[%s1 + $0x330] sm:$0xff]
  %v148 = vld [vmem:[%s1 + $0x338] sm:$0xff]
  %v149 = vld [vmem:[%s1 + $0x340] sm:$0xff]
  %v150 = vld [vmem:[%s1 + $0x348] sm:$0xff]
  %v151 = vld [vmem:[%s1 + $0x350] sm:$0xff]
  %v152 = vld [vmem:[%s1 + $0x358] sm:$0xff]
  %v153 = vld [vmem:[%s1 + $0x360] sm:$0xff]
  %v154 = vld [vmem:[%s1 + $0x368] sm:$0xff]
  %v155 = vld [vmem:[%s1 + $0x370] sm:$0xff]
  %v156 = vld [vmem:[%s1 + $0x378] sm:$0xff]
  %v157 = vld [vmem:[%s1 + $0x380] sm:$0xff]
  %v158 = vld [vmem:[%s1 + $0x388] sm:$0xff]
  %v159 = vld [vmem:[%s1 + $0x390] sm:$0xff]
  %v160 = vld [vmem:[%s1 + $0x398] sm:$0xff]
  %v161 = vld [vmem:[%s1 + $0x3a0] sm:$0xff]
  %v162 = vld [vmem:[%s1 + $0x3a8] sm:$0xff]
  %v163 = vld [vmem:[%s1 + $0x3b0] sm:$0xff]
  %v164 = vld [vmem:[%s1 + $0x3b8] sm:$0xff]
  %v165 = vld [vmem:[%s1 + $0x3c0] sm:$0xff]
  %v166 = vld [vmem:[%s1 + $0x3c8] sm:$0xff]
  %v167 = vld [vmem:[%s1 + $0x3d0] sm:$0xff]
  %v168 = vld [vmem:[%s1 + $0x3d8] sm:$0xff]
  %v169 = vld [vmem:[%s1 + $0x3e0] sm:$0xff]
  %v170 = vld [vmem:[%s1 + $0x3e8] sm:$0xff]
  %v171 = vld [vmem:[%s1 + $0x3f0] sm:$0xff]
  %v172 = vld [vmem:[%s1 + $0x3f8] sm:$0xff]
  %v173 = vld [vmem:[%s1 + $0x400] sm:$0xff]
  %v174 = vld [vmem:[%s1 + $0x408] sm:$0xff]
  %v175 = vld [vmem:[%s1 + $0x410] sm:$0xff]
  %v176 = vld [vmem:[%s1 + $0x418] sm:$0xff]
  %v177 = vld [vmem:[%s1 + $0x420] sm:$0xff]
  %v178 = vld [vmem:[%s1 + $0x428] sm:$0xff]
  %v179 = vld [vmem:[%s1 + $0x430] sm:$0xff]
  %v180 = vld [vmem:[%s1 + $0x438] sm:$0xff]
  %v181 = vld [vmem:[%s1 + $0x440] sm:$0xff]
  %v182 = vld [vmem:[%s1 + $0x448] sm:$0xff]
  %v183 = vld [vmem:[%s1 + $0x450] sm:$0xff]
  %v184 = vld [vmem:[%s1 + $0x458] sm:$0xff]
  %v185 = vld [vmem:[%s1 + $0x460] sm:$0xff]
  %v186 = vld [vmem:[%s1 + $0x468] sm:$0xff]
  %v187 = vld [vmem:[%s1 + $0x470] sm:$0xff]
  %v188 = vld [vmem:[%s1 + $0x478] sm:$0xff]
  %v189 = vld [vmem:[%s1 + $0x480] sm:$0xff]
  %v190 = vld [vmem:[%s1 + $0x488] sm:$0xff]
  %v191 = vld [vmem:[%s1 + $0x490] sm:$0xff]
  %v192 = vld [vmem:[%s1 + $0x498] sm:$0xff]
  %v193 = vld [vmem:[%s1 + $0x4a0] sm:$0xff]
  %v194 = vld [vmem:[%s1 + $0x4a8] sm:$0xff]
  %v195 = vld [vmem:[%s1 + $0x4b0] sm:$0xff]
  %v196 = vld [vmem:[%s1 + $0x4b8] sm:$0xff]
  %v197 = vld [vmem:[%s1 + $0x4c0] sm:$0xff]
  %v198 = vld [vmem:[%s1 + $0x4c8] sm:$0xff]
  %v199 = vld [vmem:[%s1 + $0x4d0] sm:$0xff]
  %v200 = vld [vmem:[%s1 + $0x4d8] sm:$0xff]
  %v201 = vld [vmem:[%s1 + $0x4e0] sm:$0xff]
  %v202 = vld [vmem:[%s1 + $0x4e8] sm:$0xff]
  %v203 = vld [vmem:[%s1 + $0x4f0] sm:$0xff]
  %v204 = vld [vmem:[%s1 + $0x4f8] sm:$0xff]
  %v205 = vld [vmem:[%s1 + $0x500] sm:$0xff]
  %v206 = vld [vmem:[%s1 + $0x508] sm:$0xff]
  %v207 = vld [vmem:[%s1 + $0x510] sm:$0xff]
  %v208 = vld [vmem:[%s1 + $0x518] sm:$0xff]
  %v209 = vld [vmem:[%s1 + $0x520] sm:$0xff]
  %v210 = vld [vmem:[%s1 + $0x528] sm:$0xff]
  %v211 = vld [vmem:[%s1 + $0x530] sm:$0xff]
  %v212 = vld [vmem:[%s1 + $0x538] sm:$0xff]
  %v213 = vld [vmem:[%s1 + $0x540] sm:$0xff]
  %v214 = vld [vmem:[%s1 + $0x548] sm:$0xff]
  %v215 = vld [vmem:[%s1 + $0x550] sm:$0xff]
  %v216 = vld [vmem:[%s1 + $0x558] sm:$0xff]
  %v217 = vld [vmem:[%s1 + $0x560] sm:$0xff]
  %v218 = vld [vmem:[%s1 + $0x568] sm:$0xff]
  %v219 = vld [vmem:[%s1 + $0x570] sm:$0xff]
  %v220 = vld [vmem:[%s1 + $0x578] sm:$0xff]
  %v221 = vld [vmem:[%s1 + $0x580] sm:$0xff]
  %v222 = vld [vmem:[%s1 + $0x588] sm:$0xff]
  %v223 = vld [vmem:[%s1 + $0x590] sm:$0xff]
  %v224 = vld [vmem:[%s1 + $0x598] sm:$0xff]
  %v225 = vld [vmem:[%s1 + $0x5a0] sm:$0xff]
  %v226 = vld [vmem:[%s1 + $0x5a8] sm:$0xff]
  %v227 = vld [vmem:[%s1 + $0x5b0] sm:$0xff]
  %v228 = vld [vmem:[%s1 + $0x5b8] sm:$0xff]
  %v229 = vld [vmem:[%s1 + $0x5c0] sm:$0xff]
  %v230 = vld [vmem:[%s1 + $0x5c8] sm:$0xff]
  %v231 = vld [vmem:[%s1 + $0x5d0] sm:$0xff]
  %v232 = vld [vmem:[%s1 + $0x5d8] sm:$0xff]
  %v233 = vld [vmem:[%s1 + $0x5e0] sm:$0xff]
  %v234 = vld [vmem:[%s1 + $0x5e8] sm:$0xff]
  %v235 = vld [vmem:[%s1 + $0x5f0] sm:$0xff]
  %v236 = vld [vmem:[%s1 + $0x5f8] sm:$0xff]
  %v237 = vld [vmem:[%s1 + $0x600] sm:$0xff]
  %v238 = vld [vmem:[%s1 + $0x608] sm:$0xff]
  %v239 = vld [vmem:[%s1 + $0x610] sm:$0xff]
  %v240 = vld [vmem:[%s1 + $0x618] sm:$0xff]
  %v241 = vld [vmem:[%s1 + $0x620] sm:$0xff]
  %v242 = vld [vmem:[%s1 + $0x628] sm:$0xff]
  %v243 = vld [vmem:[%s1 + $0x630] sm:$0xff]
  %v244 = vld [vmem:[%s1 + $0x638] sm:$0xff]
  %v245 = vld [vmem:[%s1 + $0x640] sm:$0xff]
  %v246 = vld [vmem:[%s1 + $0x648] sm:$0xff]
  %v247 = vld [vmem:[%s1 + $0x650] sm:$0xff]
  %v248 = vld [vmem:[%s1 + $0x658] sm:$0xff]
  %v249 = vld [vmem:[%s1 + $0x660] sm:$0xff]
  %v250 = vld [vmem:[%s1 + $0x668] sm:$0xff]
  %v251 = vld [vmem:[%s1 + $0x670] sm:$0xff]
  %v252 = vld [vmem:[%s1 + $0x678] sm:$0xff]
  %v253 = vld [vmem:[%s1 + $0x680] sm:$0xff]
  %v254 = vld [vmem:[%s1 + $0x688] sm:$0xff]
  %v255 = vld [vmem:[%s1 + $0x690] sm:$0xff]
  %v256 = vld [vmem:[%s1 + $0x698] sm:$0xff]
  %v257 = vld [vmem:[%s1 + $0x6a0] sm:$0xff]
  %v258 = vld [vmem:[%s1 + $0x6a8] sm:$0xff]
  %v259 = vld [vmem:[%s1 + $0x6b0] sm:$0xff]
  %v260 = vld [vmem:[%s1 + $0x6b8] sm:$0xff]
  %v261 = vld [vmem:[%s1 + $0x6c0] sm:$0xff]
  %v262 = vld [vmem:[%s1 + $0x6c8] sm:$0xff]
  %v263 = vld [vmem:[%s1 + $0x6d0] sm:$0xff]
  %v264 = vld [vmem:[%s1 + $0x6d8] sm:$0xff]
  %v265 = vld [vmem:[%s1 + $0x6e0] sm:$0xff]
  %v266 = vld [vmem:[%s1 + $0x6e8] sm:$0xff]
  %v267 = vld [vmem:[%s1 + $0x6f0] sm:$0xff]
  %v268 = vld [vmem:[%s1 + $0x6f8] sm:$0xff]
  %v269 = vld [vmem:[%s2] sm:$0xf]
  %v271 = vlaneseq
  %v272 = vshrl.u32 %v271, 7
  %v273 = vsub.s32 0, %v272
  %v274 = vrot.slane %v269, %v273
  %v275 = vlaneseq
  %v276 = vshrl.u32 %v275, 7
  %v277 = vsub.s32 1, %v276
  %v278 = vrot.slane %v269, %v277
  %v279 = vlaneseq
  %v280 = vshrl.u32 %v279, 7
  %v281 = vsub.s32 2, %v280
  %v282 = vrot.slane %v269, %v281
  %v283 = vlaneseq
  %v284 = vshrl.u32 %v283, 7
  %v285 = vsub.s32 3, %v284
  %v286 = vrot.slane %v269, %v285
  %v299 = vunpack.c.l.b16 %v37
  %v300 = vunpack.c.h.b16 %v37
  %v301 = vunpack.c.l.b16 %v38
  %v302 = vunpack.c.h.b16 %v38
  %v303 = vunpack.c.l.b16 %v39
  %v304 = vunpack.c.h.b16 %v39
  %v305 = vunpack.c.l.b16 %v40
  %v306 = vunpack.c.l.b16 %v41
  %v307 = vunpack.c.h.b16 %v41
  %v308 = vunpack.c.l.b16 %v42
  %v309 = vunpack.c.h.b16 %v42
  %v310 = vunpack.c.l.b16 %v43
  %v311 = vunpack.c.h.b16 %v43
  %v312 = vunpack.c.l.b16 %v44
  %v313 = vpack.c.b16 %v306, %v299
  %v314 = vpack.c.b16 %v307, %v300
  %v315 = vpack.c.b16 %v308, %v301
  %v316 = vpack.c.b16 %v309, %v302
  %v317 = vpack.c.b16 %v310, %v303
  %v318 = vpack.c.b16 %v311, %v304
  %v319 = vpack.c.b16 %v312, %v305
  %v551 = vunpack.c.l.b16 %v45
  %v552 = vunpack.c.h.b16 %v45
  %v553 = vunpack.c.l.b16 %v46
  %v554 = vunpack.c.h.b16 %v46
  %v555 = vunpack.c.l.b16 %v47
  %v556 = vunpack.c.h.b16 %v47
  %v557 = vunpack.c.l.b16 %v48
  %v558 = vunpack.c.h.b16 %v48
  %v559 = vunpack.c.l.b16 %v49
  %v560 = vunpack.c.h.b16 %v49
  %v561 = vunpack.c.l.b16 %v50
  %v562 = vunpack.c.h.b16 %v50
  %v563 = vunpack.c.l.b16 %v51
  %v564 = vunpack.c.h.b16 %v51
  %v565 = vunpack.c.l.b16 %v52
  %v566 = vunpack.c.h.b16 %v52
  %v567 = vunpack.c.l.b16 %v53
  %v568 = vunpack.c.h.b16 %v53
  %v569 = vunpack.c.l.b16 %v54
  %v570 = vunpack.c.h.b16 %v54
  %v571 = vunpack.c.l.b16 %v55
  %v572 = vunpack.c.h.b16 %v55
  %v573 = vunpack.c.l.b16 %v56
  %v574 = vunpack.c.h.b16 %v56
  %v575 = vunpack.c.l.b16 %v57
  %v576 = vunpack.c.h.b16 %v57
  %v577 = vunpack.c.l.b16 %v58
  %v578 = vunpack.c.h.b16 %v58
  %v579 = vunpack.c.l.b16 %v59
  %v580 = vunpack.c.h.b16 %v59
  %v581 = vunpack.c.l.b16 %v60
  %v582 = vunpack.c.h.b16 %v60
  %v583 = vunpack.c.l.b16 %v61
  %v584 = vunpack.c.h.b16 %v61
  %v585 = vunpack.c.l.b16 %v62
  %v586 = vunpack.c.h.b16 %v62
  %v587 = vunpack.c.l.b16 %v63
  %v588 = vunpack.c.h.b16 %v63
  %v589 = vunpack.c.l.b16 %v64
  %v590 = vunpack.c.h.b16 %v64
  %v591 = vunpack.c.l.b16 %v65
  %v592 = vunpack.c.h.b16 %v65
  %v593 = vunpack.c.l.b16 %v66
  %v594 = vunpack.c.h.b16 %v66
  %v595 = vunpack.c.l.b16 %v67
  %v596 = vunpack.c.h.b16 %v67
  %v597 = vunpack.c.l.b16 %v68
  %v598 = vunpack.c.h.b16 %v68
  %v599 = vunpack.c.l.b16 %v69
  %v600 = vunpack.c.h.b16 %v69
  %v601 = vunpack.c.l.b16 %v70
  %v602 = vunpack.c.h.b16 %v70
  %v603 = vunpack.c.l.b16 %v71
  %v604 = vunpack.c.h.b16 %v71
  %v605 = vunpack.c.l.b16 %v72
  %v606 = vunpack.c.h.b16 %v72
  %v607 = vunpack.c.l.b16 %v73
  %v608 = vunpack.c.h.b16 %v73
  %v609 = vunpack.c.l.b16 %v74
  %v610 = vunpack.c.h.b16 %v74
  %v611 = vunpack.c.l.b16 %v75
  %v612 = vunpack.c.h.b16 %v75
  %v613 = vunpack.c.l.b16 %v76
  %v614 = vunpack.c.h.b16 %v76
  %v615 = vunpack.c.l.b16 %v77
  %v616 = vunpack.c.h.b16 %v77
  %v617 = vunpack.c.l.b16 %v78
  %v618 = vunpack.c.h.b16 %v78
  %v619 = vunpack.c.l.b16 %v79
  %v620 = vunpack.c.h.b16 %v79
  %v621 = vunpack.c.l.b16 %v80
  %v622 = vunpack.c.h.b16 %v80
  %v623 = vunpack.c.l.b16 %v81
  %v624 = vunpack.c.h.b16 %v81
  %v625 = vunpack.c.l.b16 %v82
  %v626 = vunpack.c.h.b16 %v82
  %v627 = vunpack.c.l.b16 %v83
  %v628 = vunpack.c.h.b16 %v83
  %v629 = vunpack.c.l.b16 %v84
  %v630 = vunpack.c.h.b16 %v84
  %v631 = vunpack.c.l.b16 %v85
  %v632 = vunpack.c.h.b16 %v85
  %v633 = vunpack.c.l.b16 %v86
  %v634 = vunpack.c.h.b16 %v86
  %v635 = vunpack.c.l.b16 %v87
  %v636 = vunpack.c.h.b16 %v87
  %v637 = vunpack.c.l.b16 %v88
  %v638 = vunpack.c.h.b16 %v88
  %v639 = vunpack.c.l.b16 %v89
  %v640 = vunpack.c.h.b16 %v89
  %v641 = vunpack.c.l.b16 %v90
  %v642 = vunpack.c.h.b16 %v90
  %v643 = vunpack.c.l.b16 %v91
  %v644 = vunpack.c.h.b16 %v91
  %v645 = vunpack.c.l.b16 %v92
  %v646 = vunpack.c.h.b16 %v92
  %v647 = vunpack.c.l.b16 %v93
  %v648 = vunpack.c.h.b16 %v93
  %v649 = vunpack.c.l.b16 %v94
  %v650 = vunpack.c.h.b16 %v94
  %v651 = vunpack.c.l.b16 %v95
  %v652 = vunpack.c.h.b16 %v95
  %v653 = vunpack.c.l.b16 %v96
  %v654 = vunpack.c.h.b16 %v96
  %v655 = vunpack.c.l.b16 %v97
  %v656 = vunpack.c.h.b16 %v97
  %v657 = vunpack.c.l.b16 %v98
  %v658 = vunpack.c.h.b16 %v98
  %v659 = vunpack.c.l.b16 %v99
  %v660 = vunpack.c.h.b16 %v99
  %v661 = vunpack.c.l.b16 %v100
  %v662 = vunpack.c.h.b16 %v100
  %v663 = vunpack.c.l.b16 %v101
  %v664 = vunpack.c.h.b16 %v101
  %v665 = vunpack.c.l.b16 %v102
  %v666 = vunpack.c.h.b16 %v102
  %v667 = vunpack.c.l.b16 %v103
  %v668 = vunpack.c.h.b16 %v103
  %v669 = vunpack.c.l.b16 %v104
  %v670 = vunpack.c.h.b16 %v104
  %v671 = vunpack.c.l.b16 %v105
  %v672 = vunpack.c.h.b16 %v105
  %v673 = vunpack.c.l.b16 %v106
  %v674 = vunpack.c.h.b16 %v106
  %v675 = vunpack.c.l.b16 %v107
  %v676 = vunpack.c.h.b16 %v107
  %v677 = vunpack.c.l.b16 %v108
  %v678 = vunpack.c.h.b16 %v108
  %v679 = vunpack.c.l.b16 %v109
  %v680 = vunpack.c.h.b16 %v109
  %v681 = vunpack.c.l.b16 %v110
  %v682 = vunpack.c.h.b16 %v110
  %v683 = vunpack.c.l.b16 %v111
  %v684 = vunpack.c.h.b16 %v111
  %v685 = vunpack.c.l.b16 %v112
  %v686 = vunpack.c.h.b16 %v112
  %v687 = vunpack.c.l.b16 %v113
  %v688 = vunpack.c.h.b16 %v113
  %v689 = vunpack.c.l.b16 %v114
  %v690 = vunpack.c.h.b16 %v114
  %v691 = vunpack.c.l.b16 %v115
  %v692 = vunpack.c.h.b16 %v115
  %v693 = vunpack.c.l.b16 %v116
  %v694 = vunpack.c.h.b16 %v116
  %v695 = vunpack.c.l.b16 %v117
  %v696 = vunpack.c.h.b16 %v117
  %v697 = vunpack.c.l.b16 %v118
  %v698 = vunpack.c.h.b16 %v118
  %v699 = vunpack.c.l.b16 %v119
  %v700 = vunpack.c.h.b16 %v119
  %v701 = vunpack.c.l.b16 %v120
  %v702 = vunpack.c.h.b16 %v120
  %v703 = vunpack.c.l.b16 %v121
  %v704 = vunpack.c.h.b16 %v121
  %v705 = vunpack.c.l.b16 %v122
  %v706 = vunpack.c.h.b16 %v122
  %v707 = vunpack.c.l.b16 %v123
  %v708 = vunpack.c.h.b16 %v123
  %v709 = vunpack.c.l.b16 %v124
  %v710 = vunpack.c.h.b16 %v124
  %v711 = vunpack.c.l.b16 %v125
  %v712 = vunpack.c.h.b16 %v125
  %v713 = vunpack.c.l.b16 %v126
  %v714 = vunpack.c.h.b16 %v126
  %v715 = vunpack.c.l.b16 %v127
  %v716 = vunpack.c.h.b16 %v127
  %v717 = vunpack.c.l.b16 %v128
  %v718 = vunpack.c.h.b16 %v128
  %v719 = vunpack.c.l.b16 %v129
  %v720 = vunpack.c.h.b16 %v129
  %v721 = vunpack.c.l.b16 %v130
  %v722 = vunpack.c.h.b16 %v130
  %v723 = vunpack.c.l.b16 %v131
  %v724 = vunpack.c.h.b16 %v131
  %v725 = vunpack.c.l.b16 %v132
  %v726 = vunpack.c.h.b16 %v132
  %v727 = vunpack.c.l.b16 %v133
  %v728 = vunpack.c.h.b16 %v133
  %v729 = vunpack.c.l.b16 %v134
  %v730 = vunpack.c.h.b16 %v134
  %v731 = vunpack.c.l.b16 %v135
  %v732 = vunpack.c.h.b16 %v135
  %v733 = vunpack.c.l.b16 %v136
  %v734 = vunpack.c.h.b16 %v136
  %v735 = vunpack.c.l.b16 %v137
  %v736 = vunpack.c.h.b16 %v137
  %v737 = vunpack.c.l.b16 %v138
  %v738 = vunpack.c.h.b16 %v138
  %v739 = vunpack.c.l.b16 %v139
  %v740 = vunpack.c.h.b16 %v139
  %v741 = vunpack.c.l.b16 %v140
  %v742 = vunpack.c.h.b16 %v140
  %v743 = vunpack.c.l.b16 %v141
  %v744 = vunpack.c.h.b16 %v141
  %v745 = vunpack.c.l.b16 %v142
  %v746 = vunpack.c.h.b16 %v142
  %v747 = vunpack.c.l.b16 %v143
  %v748 = vunpack.c.h.b16 %v143
  %v749 = vunpack.c.l.b16 %v144
  %v750 = vunpack.c.h.b16 %v144
  %v751 = vunpack.c.l.b16 %v145
  %v752 = vunpack.c.h.b16 %v145
  %v753 = vunpack.c.l.b16 %v146
  %v754 = vunpack.c.h.b16 %v146
  %v755 = vunpack.c.l.b16 %v147
  %v756 = vunpack.c.h.b16 %v147
  %v757 = vunpack.c.l.b16 %v148
  %v758 = vunpack.c.h.b16 %v148
  %v759 = vunpack.c.l.b16 %v149
  %v760 = vunpack.c.h.b16 %v149
  %v761 = vunpack.c.l.b16 %v150
  %v762 = vunpack.c.h.b16 %v150
  %v763 = vunpack.c.l.b16 %v151
  %v764 = vunpack.c.h.b16 %v151
  %v765 = vunpack.c.l.b16 %v152
  %v766 = vunpack.c.h.b16 %v152
  %v767 = vunpack.c.l.b16 %v153
  %v768 = vunpack.c.h.b16 %v153
  %v769 = vunpack.c.l.b16 %v154
  %v770 = vunpack.c.h.b16 %v154
  %v771 = vunpack.c.l.b16 %v155
  %v772 = vunpack.c.h.b16 %v155
  %v773 = vunpack.c.l.b16 %v156
  %v774 = vunpack.c.h.b16 %v156
  %v775 = vunpack.c.l.b16 %v157
  %v776 = vunpack.c.h.b16 %v157
  %v777 = vunpack.c.l.b16 %v158
  %v778 = vunpack.c.h.b16 %v158
  %v779 = vunpack.c.l.b16 %v159
  %v780 = vunpack.c.h.b16 %v159
  %v781 = vunpack.c.l.b16 %v160
  %v782 = vunpack.c.h.b16 %v160
  %v783 = vunpack.c.l.b16 %v161
  %v784 = vunpack.c.h.b16 %v161
  %v785 = vunpack.c.l.b16 %v162
  %v786 = vunpack.c.h.b16 %v162
  %v787 = vunpack.c.l.b16 %v163
  %v788 = vunpack.c.h.b16 %v163
  %v789 = vunpack.c.l.b16 %v164
  %v790 = vunpack.c.h.b16 %v164
  %v791 = vunpack.c.l.b16 %v165
  %v792 = vunpack.c.h.b16 %v165
  %v793 = vunpack.c.l.b16 %v166
  %v794 = vunpack.c.h.b16 %v166
  %v795 = vunpack.c.l.b16 %v167
  %v796 = vunpack.c.h.b16 %v167
  %v797 = vunpack.c.l.b16 %v168
  %v798 = vunpack.c.h.b16 %v168
  %v799 = vunpack.c.l.b16 %v169
  %v800 = vunpack.c.h.b16 %v169
  %v801 = vunpack.c.l.b16 %v170
  %v802 = vunpack.c.h.b16 %v170
  %v803 = vunpack.c.l.b16 %v171
  %v804 = vunpack.c.h.b16 %v171
  %v805 = vunpack.c.l.b16 %v172
  %v806 = vunpack.c.h.b16 %v172
  %v807 = vunpack.c.l.b16 %v173
  %v808 = vunpack.c.h.b16 %v173
  %v809 = vunpack.c.l.b16 %v174
  %v810 = vunpack.c.h.b16 %v174
  %v811 = vunpack.c.l.b16 %v175
  %v812 = vunpack.c.h.b16 %v175
  %v813 = vunpack.c.l.b16 %v176
  %v814 = vunpack.c.h.b16 %v176
  %v815 = vunpack.c.l.b16 %v177
  %v816 = vunpack.c.h.b16 %v177
  %v817 = vunpack.c.l.b16 %v178
  %v818 = vunpack.c.h.b16 %v178
  %v819 = vunpack.c.l.b16 %v179
  %v820 = vunpack.c.h.b16 %v179
  %v821 = vunpack.c.l.b16 %v180
  %v822 = vunpack.c.h.b16 %v180
  %v823 = vunpack.c.l.b16 %v181
  %v824 = vunpack.c.h.b16 %v181
  %v825 = vunpack.c.l.b16 %v182
  %v826 = vunpack.c.h.b16 %v182
  %v827 = vunpack.c.l.b16 %v183
  %v828 = vunpack.c.h.b16 %v183
  %v829 = vunpack.c.l.b16 %v184
  %v830 = vunpack.c.h.b16 %v184
  %v831 = vunpack.c.l.b16 %v185
  %v832 = vunpack.c.h.b16 %v185
  %v833 = vunpack.c.l.b16 %v186
  %v834 = vunpack.c.h.b16 %v186
  %v835 = vunpack.c.l.b16 %v187
  %v836 = vunpack.c.h.b16 %v187
  %v837 = vunpack.c.l.b16 %v188
  %v838 = vunpack.c.h.b16 %v188
  %v839 = vunpack.c.l.b16 %v189
  %v840 = vunpack.c.h.b16 %v189
  %v841 = vunpack.c.l.b16 %v190
  %v842 = vunpack.c.h.b16 %v190
  %v843 = vunpack.c.l.b16 %v191
  %v844 = vunpack.c.h.b16 %v191
  %v845 = vunpack.c.l.b16 %v192
  %v846 = vunpack.c.h.b16 %v192
  %v847 = vunpack.c.l.b16 %v193
  %v848 = vunpack.c.h.b16 %v193
  %v849 = vunpack.c.l.b16 %v194
  %v850 = vunpack.c.h.b16 %v194
  %v851 = vunpack.c.l.b16 %v195
  %v852 = vunpack.c.h.b16 %v195
  %v853 = vunpack.c.l.b16 %v196
  %v854 = vunpack.c.h.b16 %v196
  %v855 = vunpack.c.l.b16 %v197
  %v856 = vunpack.c.h.b16 %v197
  %v857 = vunpack.c.l.b16 %v198
  %v858 = vunpack.c.h.b16 %v198
  %v859 = vunpack.c.l.b16 %v199
  %v860 = vunpack.c.h.b16 %v199
  %v861 = vunpack.c.l.b16 %v200
  %v862 = vunpack.c.h.b16 %v200
  %v863 = vunpack.c.l.b16 %v201
  %v864 = vunpack.c.h.b16 %v201
  %v865 = vunpack.c.l.b16 %v202
  %v866 = vunpack.c.h.b16 %v202
  %v867 = vunpack.c.l.b16 %v203
  %v868 = vunpack.c.h.b16 %v203
  %v869 = vunpack.c.l.b16 %v204
  %v870 = vunpack.c.h.b16 %v204
  %v871 = vunpack.c.l.b16 %v205
  %v872 = vunpack.c.h.b16 %v205
  %v873 = vunpack.c.l.b16 %v206
  %v874 = vunpack.c.h.b16 %v206
  %v875 = vunpack.c.l.b16 %v207
  %v876 = vunpack.c.h.b16 %v207
  %v877 = vunpack.c.l.b16 %v208
  %v878 = vunpack.c.h.b16 %v208
  %v879 = vunpack.c.l.b16 %v209
  %v880 = vunpack.c.h.b16 %v209
  %v881 = vunpack.c.l.b16 %v210
  %v882 = vunpack.c.h.b16 %v210
  %v883 = vunpack.c.l.b16 %v211
  %v884 = vunpack.c.h.b16 %v211
  %v885 = vunpack.c.l.b16 %v212
  %v886 = vunpack.c.h.b16 %v212
  %v887 = vunpack.c.l.b16 %v213
  %v888 = vunpack.c.h.b16 %v213
  %v889 = vunpack.c.l.b16 %v214
  %v890 = vunpack.c.h.b16 %v214
  %v891 = vunpack.c.l.b16 %v215
  %v892 = vunpack.c.h.b16 %v215
  %v893 = vunpack.c.l.b16 %v216
  %v894 = vunpack.c.h.b16 %v216
  %v895 = vunpack.c.l.b16 %v217
  %v896 = vunpack.c.h.b16 %v217
  %v897 = vunpack.c.l.b16 %v218
  %v898 = vunpack.c.h.b16 %v218
  %v899 = vunpack.c.l.b16 %v219
  %v900 = vunpack.c.h.b16 %v219
  %v901 = vunpack.c.l.b16 %v220
  %v902 = vunpack.c.h.b16 %v220
  %v903 = vunpack.c.l.b16 %v221
  %v904 = vunpack.c.h.b16 %v221
  %v905 = vunpack.c.l.b16 %v222
  %v906 = vunpack.c.h.b16 %v222
  %v907 = vunpack.c.l.b16 %v223
  %v908 = vunpack.c.h.b16 %v223
  %v909 = vunpack.c.l.b16 %v224
  %v910 = vunpack.c.h.b16 %v224
  %v911 = vunpack.c.l.b16 %v225
  %v912 = vunpack.c.h.b16 %v225
  %v913 = vunpack.c.l.b16 %v226
  %v914 = vunpack.c.h.b16 %v226
  %v915 = vunpack.c.l.b16 %v227
  %v916 = vunpack.c.h.b16 %v227
  %v917 = vunpack.c.l.b16 %v228
  %v918 = vunpack.c.h.b16 %v228
  %v919 = vunpack.c.l.b16 %v229
  %v920 = vunpack.c.h.b16 %v229
  %v921 = vunpack.c.l.b16 %v230
  %v922 = vunpack.c.h.b16 %v230
  %v923 = vunpack.c.l.b16 %v231
  %v924 = vunpack.c.h.b16 %v231
  %v925 = vunpack.c.l.b16 %v232
  %v926 = vunpack.c.h.b16 %v232
  %v927 = vunpack.c.l.b16 %v233
  %v928 = vunpack.c.h.b16 %v233
  %v929 = vunpack.c.l.b16 %v234
  %v930 = vunpack.c.h.b16 %v234
  %v931 = vunpack.c.l.b16 %v235
  %v932 = vunpack.c.h.b16 %v235
  %v933 = vunpack.c.l.b16 %v236
  %v934 = vunpack.c.h.b16 %v236
  %v935 = vunpack.c.l.b16 %v237
  %v936 = vunpack.c.h.b16 %v237
  %v937 = vunpack.c.l.b16 %v238
  %v938 = vunpack.c.h.b16 %v238
  %v939 = vunpack.c.l.b16 %v239
  %v940 = vunpack.c.h.b16 %v239
  %v941 = vunpack.c.l.b16 %v240
  %v942 = vunpack.c.h.b16 %v240
  %v943 = vunpack.c.l.b16 %v241
  %v944 = vunpack.c.h.b16 %v241
  %v945 = vunpack.c.l.b16 %v242
  %v946 = vunpack.c.h.b16 %v242
  %v947 = vunpack.c.l.b16 %v243
  %v948 = vunpack.c.h.b16 %v243
  %v949 = vunpack.c.l.b16 %v244
  %v950 = vunpack.c.h.b16 %v244
  %v951 = vunpack.c.l.b16 %v245
  %v952 = vunpack.c.h.b16 %v245
  %v953 = vunpack.c.l.b16 %v246
  %v954 = vunpack.c.h.b16 %v246
  %v955 = vunpack.c.l.b16 %v247
  %v956 = vunpack.c.h.b16 %v247
  %v957 = vunpack.c.l.b16 %v248
  %v958 = vunpack.c.h.b16 %v248
  %v959 = vunpack.c.l.b16 %v249
  %v960 = vunpack.c.h.b16 %v249
  %v961 = vunpack.c.l.b16 %v250
  %v962 = vunpack.c.h.b16 %v250
  %v963 = vunpack.c.l.b16 %v251
  %v964 = vunpack.c.h.b16 %v251
  %v965 = vunpack.c.l.b16 %v252
  %v966 = vunpack.c.h.b16 %v252
  %v967 = vunpack.c.l.b16 %v253
  %v968 = vunpack.c.h.b16 %v253
  %v969 = vunpack.c.l.b16 %v254
  %v970 = vunpack.c.h.b16 %v254
  %v971 = vunpack.c.l.b16 %v255
  %v972 = vunpack.c.h.b16 %v255
  %v973 = vunpack.c.l.b16 %v256
  %v974 = vunpack.c.h.b16 %v256
  %v975 = vunpack.c.l.b16 %v257
  %v976 = vunpack.c.h.b16 %v257
  %v977 = vunpack.c.l.b16 %v258
  %v978 = vunpack.c.h.b16 %v258
  %v979 = vunpack.c.l.b16 %v259
  %v980 = vunpack.c.h.b16 %v259
  %v981 = vunpack.c.l.b16 %v260
  %v982 = vunpack.c.h.b16 %v260
  %v983 = vunpack.c.l.b16 %v261
  %v984 = vunpack.c.h.b16 %v261
  %v985 = vunpack.c.l.b16 %v262
  %v986 = vunpack.c.h.b16 %v262
  %v987 = vunpack.c.l.b16 %v263
  %v988 = vunpack.c.h.b16 %v263
  %v989 = vunpack.c.l.b16 %v264
  %v990 = vunpack.c.h.b16 %v264
  %v991 = vunpack.c.l.b16 %v265
  %v992 = vunpack.c.h.b16 %v265
  %v993 = vunpack.c.l.b16 %v266
  %v994 = vunpack.c.h.b16 %v266
  %v995 = vunpack.c.l.b16 %v267
  %v996 = vunpack.c.h.b16 %v267
  %v997 = vunpack.c.l.b16 %v268
  %v998 = vunpack.c.h.b16 %v268
  %v999 = vpack.c.b16 %v555, %v551
  %v1000 = vpack.c.b16 %v556, %v552
  %v1001 = vpack.c.b16 %v557, %v553
  %v1002 = vpack.c.b16 %v558, %v554
  %v1003 = vpack.c.b16 %v563, %v559
  %v1004 = vpack.c.b16 %v564, %v560
  %v1005 = vpack.c.b16 %v565, %v561
  %v1006 = vpack.c.b16 %v566, %v562
  %v1007 = vpack.c.b16 %v571, %v567
  %v1008 = vpack.c.b16 %v572, %v568
  %v1009 = vpack.c.b16 %v573, %v569
  %v1010 = vpack.c.b16 %v574, %v570
  %v1011 = vpack.c.b16 %v579, %v575
  %v1012 = vpack.c.b16 %v580, %v576
  %v1013 = vpack.c.b16 %v581, %v577
  %v1014 = vpack.c.b16 %v582, %v578
  %v1015 = vpack.c.b16 %v587, %v583
  %v1016 = vpack.c.b16 %v588, %v584
  %v1017 = vpack.c.b16 %v589, %v585
  %v1018 = vpack.c.b16 %v590, %v586
  %v1019 = vpack.c.b16 %v595, %v591
  %v1020 = vpack.c.b16 %v596, %v592
  %v1021 = vpack.c.b16 %v597, %v593
  %v1022 = vpack.c.b16 %v598, %v594
  %v1023 = vpack.c.b16 %v603, %v599
  %v1024 = vpack.c.b16 %v604, %v600
  %v1025 = vpack.c.b16 %v605, %v601
  %v1026 = vpack.c.b16 %v606, %v602
  %v1027 = vpack.c.b16 %v611, %v607
  %v1028 = vpack.c.b16 %v612, %v608
  %v1029 = vpack.c.b16 %v613, %v609
  %v1030 = vpack.c.b16 %v614, %v610
  %v1031 = vpack.c.b16 %v619, %v615
  %v1032 = vpack.c.b16 %v620, %v616
  %v1033 = vpack.c.b16 %v621, %v617
  %v1034 = vpack.c.b16 %v622, %v618
  %v1035 = vpack.c.b16 %v627, %v623
  %v1036 = vpack.c.b16 %v628, %v624
  %v1037 = vpack.c.b16 %v629, %v625
  %v1038 = vpack.c.b16 %v630, %v626
  %v1039 = vpack.c.b16 %v635, %v631
  %v1040 = vpack.c.b16 %v636, %v632
  %v1041 = vpack.c.b16 %v637, %v633
  %v1042 = vpack.c.b16 %v638, %v634
  %v1043 = vpack.c.b16 %v643, %v639
  %v1044 = vpack.c.b16 %v644, %v640
  %v1045 = vpack.c.b16 %v645, %v641
  %v1046 = vpack.c.b16 %v646, %v642
  %v1047 = vpack.c.b16 %v651, %v647
  %v1048 = vpack.c.b16 %v652, %v648
  %v1049 = vpack.c.b16 %v653, %v649
  %v1050 = vpack.c.b16 %v654, %v650
  %v1051 = vpack.c.b16 %v659, %v655
  %v1052 = vpack.c.b16 %v660, %v656
  %v1053 = vpack.c.b16 %v661, %v657
  %v1054 = vpack.c.b16 %v662, %v658
  %v1055 = vpack.c.b16 %v667, %v663
  %v1056 = vpack.c.b16 %v668, %v664
  %v1057 = vpack.c.b16 %v669, %v665
  %v1058 = vpack.c.b16 %v670, %v666
  %v1059 = vpack.c.b16 %v675, %v671
  %v1060 = vpack.c.b16 %v676, %v672
  %v1061 = vpack.c.b16 %v677, %v673
  %v1062 = vpack.c.b16 %v678, %v674
  %v1063 = vpack.c.b16 %v683, %v679
  %v1064 = vpack.c.b16 %v684, %v680
  %v1065 = vpack.c.b16 %v685, %v681
  %v1066 = vpack.c.b16 %v686, %v682
  %v1067 = vpack.c.b16 %v691, %v687
  %v1068 = vpack.c.b16 %v692, %v688
  %v1069 = vpack.c.b16 %v693, %v689
  %v1070 = vpack.c.b16 %v694, %v690
  %v1071 = vpack.c.b16 %v699, %v695
  %v1072 = vpack.c.b16 %v700, %v696
  %v1073 = vpack.c.b16 %v701, %v697
  %v1074 = vpack.c.b16 %v702, %v698
  %v1075 = vpack.c.b16 %v707, %v703
  %v1076 = vpack.c.b16 %v708, %v704
  %v1077 = vpack.c.b16 %v709, %v705
  %v1078 = vpack.c.b16 %v710, %v706
  %v1079 = vpack.c.b16 %v715, %v711
  %v1080 = vpack.c.b16 %v716, %v712
  %v1081 = vpack.c.b16 %v717, %v713
  %v1082 = vpack.c.b16 %v718, %v714
  %v1083 = vpack.c.b16 %v723, %v719
  %v1084 = vpack.c.b16 %v724, %v720
  %v1085 = vpack.c.b16 %v725, %v721
  %v1086 = vpack.c.b16 %v726, %v722
  %v1087 = vpack.c.b16 %v731, %v727
  %v1088 = vpack.c.b16 %v732, %v728
  %v1089 = vpack.c.b16 %v733, %v729
  %v1090 = vpack.c.b16 %v734, %v730
  %v1091 = vpack.c.b16 %v739, %v735
  %v1092 = vpack.c.b16 %v740, %v736
  %v1093 = vpack.c.b16 %v741, %v737
  %v1094 = vpack.c.b16 %v742, %v738
  %v1095 = vpack.c.b16 %v747, %v743
  %v1096 = vpack.c.b16 %v748, %v744
  %v1097 = vpack.c.b16 %v749, %v745
  %v1098 = vpack.c.b16 %v750, %v746
  %v1099 = vpack.c.b16 %v755, %v751
  %v1100 = vpack.c.b16 %v756, %v752
  %v1101 = vpack.c.b16 %v757, %v753
  %v1102 = vpack.c.b16 %v758, %v754
  %v1103 = vpack.c.b16 %v763, %v759
  %v1104 = vpack.c.b16 %v764, %v760
  %v1105 = vpack.c.b16 %v765, %v761
  %v1106 = vpack.c.b16 %v766, %v762
  %v1107 = vpack.c.b16 %v771, %v767
  %v1108 = vpack.c.b16 %v772, %v768
  %v1109 = vpack.c.b16 %v773, %v769
  %v1110 = vpack.c.b16 %v774, %v770
  %v1111 = vpack.c.b16 %v779, %v775
  %v1112 = vpack.c.b16 %v780, %v776
  %v1113 = vpack.c.b16 %v781, %v777
  %v1114 = vpack.c.b16 %v782, %v778
  %v1115 = vpack.c.b16 %v787, %v783
  %v1116 = vpack.c.b16 %v788, %v784
  %v1117 = vpack.c.b16 %v789, %v785
  %v1118 = vpack.c.b16 %v790, %v786
  %v1119 = vpack.c.b16 %v795, %v791
  %v1120 = vpack.c.b16 %v796, %v792
  %v1121 = vpack.c.b16 %v797, %v793
  %v1122 = vpack.c.b16 %v798, %v794
  %v1123 = vpack.c.b16 %v803, %v799
  %v1124 = vpack.c.b16 %v804, %v800
  %v1125 = vpack.c.b16 %v805, %v801
  %v1126 = vpack.c.b16 %v806, %v802
  %v1127 = vpack.c.b16 %v811, %v807
  %v1128 = vpack.c.b16 %v812, %v808
  %v1129 = vpack.c.b16 %v813, %v809
  %v1130 = vpack.c.b16 %v814, %v810
  %v1131 = vpack.c.b16 %v819, %v815
  %v1132 = vpack.c.b16 %v820, %v816
  %v1133 = vpack.c.b16 %v821, %v817
  %v1134 = vpack.c.b16 %v822, %v818
  %v1135 = vpack.c.b16 %v827, %v823
  %v1136 = vpack.c.b16 %v828, %v824
  %v1137 = vpack.c.b16 %v829, %v825
  %v1138 = vpack.c.b16 %v830, %v826
  %v1139 = vpack.c.b16 %v835, %v831
  %v1140 = vpack.c.b16 %v836, %v832
  %v1141 = vpack.c.b16 %v837, %v833
  %v1142 = vpack.c.b16 %v838, %v834
  %v1143 = vpack.c.b16 %v843, %v839
  %v1144 = vpack.c.b16 %v844, %v840
  %v1145 = vpack.c.b16 %v845, %v841
  %v1146 = vpack.c.b16 %v846, %v842
  %v1147 = vpack.c.b16 %v851, %v847
  %v1148 = vpack.c.b16 %v852, %v848
  %v1149 = vpack.c.b16 %v853, %v849
  %v1150 = vpack.c.b16 %v854, %v850
  %v1151 = vpack.c.b16 %v859, %v855
  %v1152 = vpack.c.b16 %v860, %v856
  %v1153 = vpack.c.b16 %v861, %v857
  %v1154 = vpack.c.b16 %v862, %v858
  %v1155 = vpack.c.b16 %v867, %v863
  %v1156 = vpack.c.b16 %v868, %v864
  %v1157 = vpack.c.b16 %v869, %v865
  %v1158 = vpack.c.b16 %v870, %v866
  %v1159 = vpack.c.b16 %v875, %v871
  %v1160 = vpack.c.b16 %v876, %v872
  %v1161 = vpack.c.b16 %v877, %v873
  %v1162 = vpack.c.b16 %v878, %v874
  %v1163 = vpack.c.b16 %v883, %v879
  %v1164 = vpack.c.b16 %v884, %v880
  %v1165 = vpack.c.b16 %v885, %v881
  %v1166 = vpack.c.b16 %v886, %v882
  %v1167 = vpack.c.b16 %v891, %v887
  %v1168 = vpack.c.b16 %v892, %v888
  %v1169 = vpack.c.b16 %v893, %v889
  %v1170 = vpack.c.b16 %v894, %v890
  %v1171 = vpack.c.b16 %v899, %v895
  %v1172 = vpack.c.b16 %v900, %v896
  %v1173 = vpack.c.b16 %v901, %v897
  %v1174 = vpack.c.b16 %v902, %v898
  %v1175 = vpack.c.b16 %v907, %v903
  %v1176 = vpack.c.b16 %v908, %v904
  %v1177 = vpack.c.b16 %v909, %v905
  %v1178 = vpack.c.b16 %v910, %v906
  %v1179 = vpack.c.b16 %v915, %v911
  %v1180 = vpack.c.b16 %v916, %v912
  %v1181 = vpack.c.b16 %v917, %v913
  %v1182 = vpack.c.b16 %v918, %v914
  %v1183 = vpack.c.b16 %v923, %v919
  %v1184 = vpack.c.b16 %v924, %v920
  %v1185 = vpack.c.b16 %v925, %v921
  %v1186 = vpack.c.b16 %v926, %v922
  %v1187 = vpack.c.b16 %v931, %v927
  %v1188 = vpack.c.b16 %v932, %v928
  %v1189 = vpack.c.b16 %v933, %v929
  %v1190 = vpack.c.b16 %v934, %v930
  %v1191 = vpack.c.b16 %v939, %v935
  %v1192 = vpack.c.b16 %v940, %v936
  %v1193 = vpack.c.b16 %v941, %v937
  %v1194 = vpack.c.b16 %v942, %v938
  %v1195 = vpack.c.b16 %v947, %v943
  %v1196 = vpack.c.b16 %v948, %v944
  %v1197 = vpack.c.b16 %v949, %v945
  %v1198 = vpack.c.b16 %v950, %v946
  %v1199 = vpack.c.b16 %v955, %v951
  %v1200 = vpack.c.b16 %v956, %v952
  %v1201 = vpack.c.b16 %v957, %v953
  %v1202 = vpack.c.b16 %v958, %v954
  %v1203 = vpack.c.b16 %v963, %v959
  %v1204 = vpack.c.b16 %v964, %v960
  %v1205 = vpack.c.b16 %v965, %v961
  %v1206 = vpack.c.b16 %v966, %v962
  %v1207 = vpack.c.b16 %v971, %v967
  %v1208 = vpack.c.b16 %v972, %v968
  %v1209 = vpack.c.b16 %v973, %v969
  %v1210 = vpack.c.b16 %v974, %v970
  %v1211 = vpack.c.b16 %v979, %v975
  %v1212 = vpack.c.b16 %v980, %v976
  %v1213 = vpack.c.b16 %v981, %v977
  %v1214 = vpack.c.b16 %v982, %v978
  %v1215 = vpack.c.b16 %v987, %v983
  %v1216 = vpack.c.b16 %v988, %v984
  %v1217 = vpack.c.b16 %v989, %v985
  %v1218 = vpack.c.b16 %v990, %v986
  %v1219 = vpack.c.b16 %v995, %v991
  %v1220 = vpack.c.b16 %v996, %v992
  %v1221 = vpack.c.b16 %v997, %v993
  %v1222 = vpack.c.b16 %v998, %v994
  %1447 = vmatprep.subr.bf16.mxu0 %v1000
  %1448 = vmatpush1.bf16.msra.mxu0 %v999
  %1449 = vmatprep.subr.bf16.mxu0 %v1004
  %1450 = vmatpush1.bf16.msra.mxu0 %v1003
  %1451 = vmatprep.subr.bf16.mxu0 %v1008
  %1452 = vmatpush1.bf16.msra.mxu0 %v1007
  %1453 = vmatprep.subr.bf16.mxu0 %v1012
  %1454 = vmatpush1.bf16.msra.mxu0 %v1011
  %1455 = vmatprep.subr.bf16.mxu0 %v1016
  %1456 = vmatpush1.bf16.msra.mxu0 %v1015
  %1457 = vmatprep.subr.bf16.mxu0 %v1020
  %1458 = vmatpush1.bf16.msra.mxu0 %v1019
  %1459 = vmatprep.subr.bf16.mxu0 %v1024
  %1460 = vmatpush1.bf16.msra.mxu0 %v1023
  %1461 = vmatprep.subr.bf16.mxu0 %v1028
  %1462 = vmatpush1.bf16.msra.mxu0 %v1027
  %1463 = vmatprep.subr.bf16.mxu0 %v1032
  %1464 = vmatpush1.bf16.msra.mxu0 %v1031
  %1465 = vmatprep.subr.bf16.mxu0 %v1036
  %1466 = vmatpush1.bf16.msra.mxu0 %v1035
  %1467 = vmatprep.subr.bf16.mxu0 %v1040
  %1468 = vmatpush1.bf16.msra.mxu0 %v1039
  %1469 = vmatprep.subr.bf16.mxu0 %v1044
  %1470 = vmatpush1.bf16.msra.mxu0 %v1043
  %1471 = vmatprep.subr.bf16.mxu0 %v1048
  %1472 = vmatpush1.bf16.msra.mxu0 %v1047
  %1473 = vmatprep.subr.bf16.mxu0 %v1052
  %1474 = vmatpush1.bf16.msra.mxu0 %v1051
  %1475 = vmatprep.subr.bf16.mxu0 %v1056
  %1476 = vmatpush1.bf16.msra.mxu0 %v1055
  %1477 = vmatprep.subr.bf16.mxu0 %v1060
  %1478 = vmatpush1.bf16.msra.mxu0 %v1059
  %1479 = vmatprep.mubr.bf16.mxu0 %v314
  %1480 = vmatmul.mubr.bf16.gmra.mrb[0].mxu0 %v313
  %v1481 = vpop.f32.mrb[0].mxu0
  %v1482 = vadd.f32 %v274, %v1481
  %v1483 = vpop.f32.mrb[0].mxu0
  %v1484 = vadd.f32 %v278, %v1483
  %v1485 = vpop.f32.mrb[0].mxu0
  %v1486 = vadd.f32 %v274, %v1485
  %v1487 = vpop.f32.mrb[0].mxu0
  %v1488 = vadd.f32 %v278, %v1487
  %1489 = vdwg.mxu0
  %1490 = vmatprep.subr.bf16.mxu0 %v1064
  %1491 = vmatpush1.bf16.msra.mxu0 %v1063
  %1492 = vmatprep.subr.bf16.mxu0 %v1068
  %1493 = vmatpush1.bf16.msra.mxu0 %v1067
  %1494 = vmatprep.subr.bf16.mxu0 %v1072
  %1495 = vmatpush1.bf16.msra.mxu0 %v1071
  %1496 = vmatprep.subr.bf16.mxu0 %v1076
  %1497 = vmatpush1.bf16.msra.mxu0 %v1075
  %1498 = vmatprep.subr.bf16.mxu0 %v1080
  %1499 = vmatpush1.bf16.msra.mxu0 %v1079
  %1500 = vmatprep.subr.bf16.mxu0 %v1084
  %1501 = vmatpush1.bf16.msra.mxu0 %v1083
  %1502 = vmatprep.subr.bf16.mxu0 %v1088
  %1503 = vmatpush1.bf16.msra.mxu0 %v1087
  %1504 = vmatprep.subr.bf16.mxu0 %v1092
  %1505 = vmatpush1.bf16.msra.mxu0 %v1091
  %1506 = vmatprep.subr.bf16.mxu0 %v1096
  %1507 = vmatpush1.bf16.msra.mxu0 %v1095
  %1508 = vmatprep.subr.bf16.mxu0 %v1100
  %1509 = vmatpush1.bf16.msra.mxu0 %v1099
  %1510 = vmatprep.subr.bf16.mxu0 %v1104
  %1511 = vmatpush1.bf16.msra.mxu0 %v1103
  %1512 = vmatprep.subr.bf16.mxu0 %v1108
  %1513 = vmatpush1.bf16.msra.mxu0 %v1107
  %1514 = vmatprep.subr.bf16.mxu0 %v1112
  %1515 = vmatpush1.bf16.msra.mxu0 %v1111
  %1516 = vmatprep.subr.bf16.mxu0 %v1116
  %1517 = vmatpush1.bf16.msra.mxu0 %v1115
  %1518 = vmatprep.subr.bf16.mxu0 %v1120
  %1519 = vmatpush1.bf16.msra.mxu0 %v1119
  %1520 = vmatprep.subr.bf16.mxu0 %v1124
  %1521 = vmatpush1.bf16.msra.mxu0 %v1123
  %1522 = vmatprep.mubr.bf16.mxu0 %v316
  %1523 = vmatmul.mubr.bf16.gmra.mrb[0].mxu0 %v315
  %v1524 = vpop.f32.mrb[0].mxu0
  %v1525 = vadd.f32 %v1482, %v1524
  %v1526 = vpop.f32.mrb[0].mxu0
  %v1527 = vadd.f32 %v1484, %v1526
  %v1528 = vpop.f32.mrb[0].mxu0
  %v1529 = vadd.f32 %v1486, %v1528
  %v1530 = vpop.f32.mrb[0].mxu0
  %v1531 = vadd.f32 %v1488, %v1530
  %1532 = vdwg.mxu0
  %1533 = vmatprep.subr.bf16.mxu0 %v1128
  %1534 = vmatpush1.bf16.msra.mxu0 %v1127
  %1535 = vmatprep.subr.bf16.mxu0 %v1132
  %1536 = vmatpush1.bf16.msra.mxu0 %v1131
  %1537 = vmatprep.subr.bf16.mxu0 %v1136
  %1538 = vmatpush1.bf16.msra.mxu0 %v1135
  %1539 = vmatprep.subr.bf16.mxu0 %v1140
  %1540 = vmatpush1.bf16.msra.mxu0 %v1139
  %1541 = vmatprep.subr.bf16.mxu0 %v1144
  %1542 = vmatpush1.bf16.msra.mxu0 %v1143
  %1543 = vmatprep.subr.bf16.mxu0 %v1148
  %1544 = vmatpush1.bf16.msra.mxu0 %v1147
  %1545 = vmatprep.subr.bf16.mxu0 %v1152
  %1546 = vmatpush1.bf16.msra.mxu0 %v1151
  %1547 = vmatprep.subr.bf16.mxu0 %v1156
  %1548 = vmatpush1.bf16.msra.mxu0 %v1155
  %1549 = vmatprep.subr.bf16.mxu0 %v1160
  %1550 = vmatpush1.bf16.msra.mxu0 %v1159
  %1551 = vmatprep.subr.bf16.mxu0 %v1164
  %1552 = vmatpush1.bf16.msra.mxu0 %v1163
  %1553 = vmatprep.subr.bf16.mxu0 %v1168
  %1554 = vmatpush1.bf16.msra.mxu0 %v1167
  %1555 = vmatprep.subr.bf16.mxu0 %v1172
  %1556 = vmatpush1.bf16.msra.mxu0 %v1171
  %1557 = vmatprep.subr.bf16.mxu0 %v1176
  %1558 = vmatpush1.bf16.msra.mxu0 %v1175
  %1559 = vmatprep.subr.bf16.mxu0 %v1180
  %1560 = vmatpush1.bf16.msra.mxu0 %v1179
  %1561 = vmatprep.subr.bf16.mxu0 %v1184
  %1562 = vmatpush1.bf16.msra.mxu0 %v1183
  %1563 = vmatprep.subr.bf16.mxu0 %v1188
  %1564 = vmatpush1.bf16.msra.mxu0 %v1187
  %1565 = vmatprep.mubr.bf16.mxu0 %v318
  %1566 = vmatmul.mubr.bf16.gmra.mrb[0].mxu0 %v317
  %v1567 = vpop.f32.mrb[0].mxu0
  %v1568 = vadd.f32 %v1525, %v1567
  %v1569 = vpop.f32.mrb[0].mxu0
  %v1570 = vadd.f32 %v1527, %v1569
  %v1571 = vpop.f32.mrb[0].mxu0
  %v1572 = vadd.f32 %v1529, %v1571
  %v1573 = vpop.f32.mrb[0].mxu0
  %v1574 = vadd.f32 %v1531, %v1573
  %1575 = vdwg.mxu0
  %1576 = vmatprep.subr.bf16.mxu0 %v1192
  %1577 = vmatpush1.bf16.msra.mxu0 %v1191
  %1578 = vmatprep.subr.bf16.mxu0 %v1196
  %1579 = vmatpush1.bf16.msra.mxu0 %v1195
  %1580 = vmatprep.subr.bf16.mxu0 %v1200
  %1581 = vmatpush1.bf16.msra.mxu0 %v1199
  %1582 = vmatprep.subr.bf16.mxu0 %v1204
  %1583 = vmatpush1.bf16.msra.mxu0 %v1203
  %1584 = vmatprep.subr.bf16.mxu0 %v1208
  %1585 = vmatpush1.bf16.msra.mxu0 %v1207
  %1586 = vmatprep.subr.bf16.mxu0 %v1212
  %1587 = vmatpush1.bf16.msra.mxu0 %v1211
  %1588 = vmatprep.subr.bf16.mxu0 %v1216
  %1589 = vmatpush1.bf16.msra.mxu0 %v1215
  %1590 = vmatprep.subr.bf16.mxu0 %v1220
  %1591 = vmatpush1.bf16.msra.mxu0 %v1219
  %1592 = vmatprep.subr.bf16.mxu0 0
  %1593 = vmatpush1.bf16.msra.mxu0 0
  %1594 = vmatprep.subr.bf16.mxu0 0
  %1595 = vmatpush1.bf16.msra.mxu0 0
  %1596 = vmatprep.subr.bf16.mxu0 0
  %1597 = vmatpush1.bf16.msra.mxu0 0
  %1598 = vmatprep.subr.bf16.mxu0 0
  %1599 = vmatpush1.bf16.msra.mxu0 0
  %1600 = vmatprep.subr.bf16.mxu0 0
  %1601 = vmatpush1.bf16.msra.mxu0 0
  %1602 = vmatprep.subr.bf16.mxu0 0
  %1603 = vmatpush1.bf16.msra.mxu0 0
  %1604 = vmatprep.subr.bf16.mxu0 0
  %1605 = vmatpush1.bf16.msra.mxu0 0
  %1606 = vmatprep.subr.bf16.mxu0 0
  %1607 = vmatpush1.bf16.msra.mxu0 0
  %1608 = vmatprep.mubr.bf16.mxu0 0
  %1609 = vmatmul.mubr.bf16.gmra.mrb[0].mxu0 %v319
  %v1610 = vpop.f32.mrb[0].mxu0
  %v1611 = vadd.f32 %v1568, %v1610
  %v1612 = vpop.f32.mrb[0].mxu0
  %v1613 = vadd.f32 %v1570, %v1612
  %v1614 = vpop.f32.mrb[0].mxu0
  %v1615 = vadd.f32 %v1572, %v1614
  %v1616 = vpop.f32.mrb[0].mxu0
  %v1617 = vadd.f32 %v1574, %v1616
  %1618 = vdwg.mxu0
  %1619 = vmatprep.subr.bf16.mxu0 %v1002
  %1620 = vmatpush1.bf16.msra.mxu0 %v1001
  %1621 = vmatprep.subr.bf16.mxu0 %v1006
  %1622 = vmatpush1.bf16.msra.mxu0 %v1005
  %1623 = vmatprep.subr.bf16.mxu0 %v1010
  %1624 = vmatpush1.bf16.msra.mxu0 %v1009
  %1625 = vmatprep.subr.bf16.mxu0 %v1014
  %1626 = vmatpush1.bf16.msra.mxu0 %v1013
  %1627 = vmatprep.subr.bf16.mxu0 %v1018
  %1628 = vmatpush1.bf16.msra.mxu0 %v1017
  %1629 = vmatprep.subr.bf16.mxu0 %v1022
  %1630 = vmatpush1.bf16.msra.mxu0 %v1021
  %1631 = vmatprep.subr.bf16.mxu0 %v1026
  %1632 = vmatpush1.bf16.msra.mxu0 %v1025
  %1633 = vmatprep.subr.bf16.mxu0 %v1030
  %1634 = vmatpush1.bf16.msra.mxu0 %v1029
  %1635 = vmatprep.subr.bf16.mxu0 %v1034
  %1636 = vmatpush1.bf16.msra.mxu0 %v1033
  %1637 = vmatprep.subr.bf16.mxu0 %v1038
  %1638 = vmatpush1.bf16.msra.mxu0 %v1037
  %1639 = vmatprep.subr.bf16.mxu0 %v1042
  %1640 = vmatpush1.bf16.msra.mxu0 %v1041
  %1641 = vmatprep.subr.bf16.mxu0 %v1046
  %1642 = vmatpush1.bf16.msra.mxu0 %v1045
  %1643 = vmatprep.subr.bf16.mxu0 %v1050
  %1644 = vmatpush1.bf16.msra.mxu0 %v1049
  %1645 = vmatprep.subr.bf16.mxu0 %v1054
  %1646 = vmatpush1.bf16.msra.mxu0 %v1053
  %1647 = vmatprep.subr.bf16.mxu0 %v1058
  %1648 = vmatpush1.bf16.msra.mxu0 %v1057
  %1649 = vmatprep.subr.bf16.mxu0 %v1062
  %1650 = vmatpush1.bf16.msra.mxu0 %v1061
  %1651 = vmatprep.mubr.bf16.mxu0 %v314
  %1652 = vmatmul.mubr.bf16.gmra.mrb[0].mxu0 %v313
  %v1653 = vpop.f32.mrb[0].mxu0
  %v1654 = vadd.f32 %v282, %v1653
  %v1655 = vpop.f32.mrb[0].mxu0
  %v1656 = vadd.f32 %v286, %v1655
  %v1657 = vpop.f32.mrb[0].mxu0
  %v1658 = vadd.f32 %v282, %v1657
  %v1659 = vpop.f32.mrb[0].mxu0
  %v1660 = vadd.f32 %v286, %v1659
  %1661 = vdwg.mxu0
  %1662 = vmatprep.subr.bf16.mxu0 %v1066
  %1663 = vmatpush1.bf16.msra.mxu0 %v1065
  %1664 = vmatprep.subr.bf16.mxu0 %v1070
  %1665 = vmatpush1.bf16.msra.mxu0 %v1069
  %1666 = vmatprep.subr.bf16.mxu0 %v1074
  %1667 = vmatpush1.bf16.msra.mxu0 %v1073
  %1668 = vmatprep.subr.bf16.mxu0 %v1078
  %1669 = vmatpush1.bf16.msra.mxu0 %v1077
  %1670 = vmatprep.subr.bf16.mxu0 %v1082
  %1671 = vmatpush1.bf16.msra.mxu0 %v1081
  %1672 = vmatprep.subr.bf16.mxu0 %v1086
  %1673 = vmatpush1.bf16.msra.mxu0 %v1085
  %1674 = vmatprep.subr.bf16.mxu0 %v1090
  %1675 = vmatpush1.bf16.msra.mxu0 %v1089
  %1676 = vmatprep.subr.bf16.mxu0 %v1094
  %1677 = vmatpush1.bf16.msra.mxu0 %v1093
  %1678 = vmatprep.subr.bf16.mxu0 %v1098
  %1679 = vmatpush1.bf16.msra.mxu0 %v1097
  %1680 = vmatprep.subr.bf16.mxu0 %v1102
  %1681 = vmatpush1.bf16.msra.mxu0 %v1101
  %1682 = vmatprep.subr.bf16.mxu0 %v1106
  %1683 = vmatpush1.bf16.msra.mxu0 %v1105
  %1684 = vmatprep.subr.bf16.mxu0 %v1110
  %1685 = vmatpush1.bf16.msra.mxu0 %v1109
  %1686 = vmatprep.subr.bf16.mxu0 %v1114
  %1687 = vmatpush1.bf16.msra.mxu0 %v1113
  %1688 = vmatprep.subr.bf16.mxu0 %v1118
  %1689 = vmatpush1.bf16.msra.mxu0 %v1117
  %1690 = vmatprep.subr.bf16.mxu0 %v1122
  %1691 = vmatpush1.bf16.msra.mxu0 %v1121
  %1692 = vmatprep.subr.bf16.mxu0 %v1126
  %1693 = vmatpush1.bf16.msra.mxu0 %v1125
  %1694 = vmatprep.mubr.bf16.mxu0 %v316
  %1695 = vmatmul.mubr.bf16.gmra.mrb[0].mxu0 %v315
  %v1696 = vpop.f32.mrb[0].mxu0
  %v1697 = vadd.f32 %v1654, %v1696
  %v1698 = vpop.f32.mrb[0].mxu0
  %v1699 = vadd.f32 %v1656, %v1698
  %v1700 = vpop.f32.mrb[0].mxu0
  %v1701 = vadd.f32 %v1658, %v1700
  %v1702 = vpop.f32.mrb[0].mxu0
  %v1703 = vadd.f32 %v1660, %v1702
  %1704 = vdwg.mxu0
  %1705 = vmatprep.subr.bf16.mxu0 %v1130
  %1706 = vmatpush1.bf16.msra.mxu0 %v1129
  %1707 = vmatprep.subr.bf16.mxu0 %v1134
  %1708 = vmatpush1.bf16.msra.mxu0 %v1133
  %1709 = vmatprep.subr.bf16.mxu0 %v1138
  %1710 = vmatpush1.bf16.msra.mxu0 %v1137
  %1711 = vmatprep.subr.bf16.mxu0 %v1142
  %1712 = vmatpush1.bf16.msra.mxu0 %v1141
  %1713 = vmatprep.subr.bf16.mxu0 %v1146
  %1714 = vmatpush1.bf16.msra.mxu0 %v1145
  %1715 = vmatprep.subr.bf16.mxu0 %v1150
  %1716 = vmatpush1.bf16.msra.mxu0 %v1149
  %1717 = vmatprep.subr.bf16.mxu0 %v1154
  %1718 = vmatpush1.bf16.msra.mxu0 %v1153
  %1719 = vmatprep.subr.bf16.mxu0 %v1158
  %1720 = vmatpush1.bf16.msra.mxu0 %v1157
  %1721 = vmatprep.subr.bf16.mxu0 %v1162
  %1722 = vmatpush1.bf16.msra.mxu0 %v1161
  %1723 = vmatprep.subr.bf16.mxu0 %v1166
  %1724 = vmatpush1.bf16.msra.mxu0 %v1165
  %1725 = vmatprep.subr.bf16.mxu0 %v1170
  %1726 = vmatpush1.bf16.msra.mxu0 %v1169
  %1727 = vmatprep.subr.bf16.mxu0 %v1174
  %1728 = vmatpush1.bf16.msra.mxu0 %v1173
  %1729 = vmatprep.subr.bf16.mxu0 %v1178
  %1730 = vmatpush1.bf16.msra.mxu0 %v1177
  %1731 = vmatprep.subr.bf16.mxu0 %v1182
  %1732 = vmatpush1.bf16.msra.mxu0 %v1181
  %1733 = vmatprep.subr.bf16.mxu0 %v1186
  %1734 = vmatpush1.bf16.msra.mxu0 %v1185
  %1735 = vmatprep.subr.bf16.mxu0 %v1190
  %1736 = vmatpush1.bf16.msra.mxu0 %v1189
  %1737 = vmatprep.mubr.bf16.mxu0 %v318
  %1738 = vmatmul.mubr.bf16.gmra.mrb[0].mxu0 %v317
  %v1739 = vpop.f32.mrb[0].mxu0
  %v1740 = vadd.f32 %v1697, %v1739
  %v1741 = vpop.f32.mrb[0].mxu0
  %v1742 = vadd.f32 %v1699, %v1741
  %v1743 = vpop.f32.mrb[0].mxu0
  %v1744 = vadd.f32 %v1701, %v1743
  %v1745 = vpop.f32.mrb[0].mxu0
  %v1746 = vadd.f32 %v1703, %v1745
  %1747 = vdwg.mxu0
  %1748 = vmatprep.subr.bf16.mxu0 %v1194
  %1749 = vmatpush1.bf16.msra.mxu0 %v1193
  %1750 = vmatprep.subr.bf16.mxu0 %v1198
  %1751 = vmatpush1.bf16.msra.mxu0 %v1197
  %1752 = vmatprep.subr.bf16.mxu0 %v1202
  %1753 = vmatpush1.bf16.msra.mxu0 %v1201
  %1754 = vmatprep.subr.bf16.mxu0 %v1206
  %1755 = vmatpush1.bf16.msra.mxu0 %v1205
  %1756 = vmatprep.subr.bf16.mxu0 %v1210
  %1757 = vmatpush1.bf16.msra.mxu0 %v1209
  %1758 = vmatprep.subr.bf16.mxu0 %v1214
  %1759 = vmatpush1.bf16.msra.mxu0 %v1213
  %1760 = vmatprep.subr.bf16.mxu0 %v1218
  %1761 = vmatpush1.bf16.msra.mxu0 %v1217
  %1762 = vmatprep.subr.bf16.mxu0 %v1222
  %1763 = vmatpush1.bf16.msra.mxu0 %v1221
  %1764 = vmatprep.subr.bf16.mxu0 0
  %1765 = vmatpush1.bf16.msra.mxu0 0
  %1766 = vmatprep.subr.bf16.mxu0 0
  %1767 = vmatpush1.bf16.msra.mxu0 0
  %1768 = vmatprep.subr.bf16.mxu0 0
  %1769 = vmatpush1.bf16.msra.mxu0 0
  %1770 = vmatprep.subr.bf16.mxu0 0
  %1771 = vmatpush1.bf16.msra.mxu0 0
  %1772 = vmatprep.subr.bf16.mxu0 0
  %1773 = vmatpush1.bf16.msra.mxu0 0
  %1774 = vmatprep.subr.bf16.mxu0 0
  %1775 = vmatpush1.bf16.msra.mxu0 0
  %1776 = vmatprep.subr.bf16.mxu0 0
  %1777 = vmatpush1.bf16.msra.mxu0 0
  %1778 = vmatprep.subr.bf16.mxu0 0
  %1779 = vmatpush1.bf16.msra.mxu0 0
  %1780 = vmatprep.mubr.bf16.mxu0 0
  %1781 = vmatmul.mubr.bf16.gmra.mrb[0].mxu0 %v319
  %v1782 = vpop.f32.mrb[0].mxu0
  %v1783 = vadd.f32 %v1740, %v1782
  %v1784 = vpop.f32.mrb[0].mxu0
  %v1785 = vadd.f32 %v1742, %v1784
  %v1786 = vpop.f32.mrb[0].mxu0
  %v1787 = vadd.f32 %v1744, %v1786
  %v1788 = vpop.f32.mrb[0].mxu0
  %v1789 = vadd.f32 %v1746, %v1788
  %1790 = vdwg.mxu0
  %v1791 = vmax.f32 %v1611, 0.0
  %v1792 = vmax.f32 %v1613, 0.0
  %v1793 = vmax.f32 %v1783, 0.0
  %v1794 = vmax.f32 %v1785, 0.0
  %v1795 = vmax.f32 %v1615, 0.0
  %v1796 = vmax.f32 %v1617, 0.0
  %v1797 = vmax.f32 %v1787, 0.0
  %v1798 = vmax.f32 %v1789, 0.0
  %v1799 = vpack.c.bf16 %v1795, %v1791
  %v1800 = vpack.c.bf16 %v1796, %v1792
  %v1801 = vpack.c.bf16 %v1797, %v1793
  %v1802 = vpack.c.bf16 %v1798, %v1794
  %v1807 = vunpack.c.l.b16 %v1799
  %v1808 = vunpack.c.l.b16 %v1800
  %v1809 = vunpack.c.l.b16 %v1801
  %v1810 = vunpack.c.l.b16 %v1802
  %v1811 = vunpack.c.h.b16 %v1799
  %v1812 = vunpack.c.h.b16 %v1800
  %v1813 = vunpack.c.h.b16 %v1801
  %v1814 = vunpack.c.h.b16 %v1802
  %v1815 = vpack.c.b16 %v1808, %v1807
  %v1816 = vpack.c.b16 %v1810, %v1809
  %v1817 = vpack.c.b16 %v1812, %v1811
  %v1818 = vpack.c.b16 %v1814, %v1813
  %1823 = vst [vmem:[%s9] sm:$0xff] %v1815
  %1824 = vst [vmem:[%s9 + $0x8] sm:$0xff] %v1816
  %1825 = vst [vmem:[%s9 + $0x10] sm:$0xff] %v1817
  %1826 = vst [vmem:[%s9 + $0x18] sm:$0xff] %v1818
  %v1827 = vld [vmem:[%s3] sm:$0xff]
  %v1828 = vld [vmem:[%s3 + $0x8] sm:$0xff]
  %v1829 = vld [vmem:[%s3 + $0x10] sm:$0xff]
  %v1830 = vld [vmem:[%s3 + $0x18] sm:$0xff]
  %v1831 = vld [vmem:[%s3 + $0x20] sm:$0xff]
  %v1832 = vld [vmem:[%s3 + $0x28] sm:$0xff]
  %v1833 = vld [vmem:[%s3 + $0x30] sm:$0xff]
  %v1834 = vld [vmem:[%s3 + $0x38] sm:$0xff]
  %v1835 = vld [vmem:[%s3 + $0x40] sm:$0xff]
  %v1836 = vld [vmem:[%s3 + $0x48] sm:$0xff]
  %v1837 = vld [vmem:[%s3 + $0x50] sm:$0xff]
  %v1838 = vld [vmem:[%s3 + $0x58] sm:$0xff]
  %v1839 = vld [vmem:[%s3 + $0x60] sm:$0xff]
  %v1840 = vld [vmem:[%s3 + $0x68] sm:$0xff]
  %v1841 = vld [vmem:[%s3 + $0x70] sm:$0xff]
  %v1842 = vld [vmem:[%s3 + $0x78] sm:$0xff]
  %v1843 = vld [vmem:[%s3 + $0x80] sm:$0xff]
  %v1844 = vld [vmem:[%s3 + $0x88] sm:$0xff]
  %v1845 = vld [vmem:[%s3 + $0x90] sm:$0xff]
  %v1846 = vld [vmem:[%s3 + $0x98] sm:$0xff]
  %v1847 = vld [vmem:[%s3 + $0xa0] sm:$0xff]
  %v1848 = vld [vmem:[%s3 + $0xa8] sm:$0xff]
  %v1849 = vld [vmem:[%s3 + $0xb0] sm:$0xff]
  %v1850 = vld [vmem:[%s3 + $0xb8] sm:$0xff]
  %v1851 = vld [vmem:[%s3 + $0xc0] sm:$0xff]
  %v1852 = vld [vmem:[%s3 + $0xc8] sm:$0xff]
  %v1853 = vld [vmem:[%s3 + $0xd0] sm:$0xff]
  %v1854 = vld [vmem:[%s3 + $0xd8] sm:$0xff]
  %v1855 = vld [vmem:[%s3 + $0xe0] sm:$0xff]
  %v1856 = vld [vmem:[%s3 + $0xe8] sm:$0xff]
  %v1857 = vld [vmem:[%s3 + $0xf0] sm:$0xff]
  %v1858 = vld [vmem:[%s3 + $0xf8] sm:$0xff]
  %v1859 = vld [vmem:[%s3 + $0x100] sm:$0xff]
  %v1860 = vld [vmem:[%s3 + $0x108] sm:$0xff]
  %v1861 = vld [vmem:[%s3 + $0x110] sm:$0xff]
  %v1862 = vld [vmem:[%s3 + $0x118] sm:$0xff]
  %v1863 = vld [vmem:[%s3 + $0x120] sm:$0xff]
  %v1864 = vld [vmem:[%s3 + $0x128] sm:$0xff]
  %v1865 = vld [vmem:[%s3 + $0x130] sm:$0xff]
  %v1866 = vld [vmem:[%s3 + $0x138] sm:$0xff]
  %v1867 = vld [vmem:[%s3 + $0x140] sm:$0xff]
  %v1868 = vld [vmem:[%s3 + $0x148] sm:$0xff]
  %v1869 = vld [vmem:[%s3 + $0x150] sm:$0xff]
  %v1870 = vld [vmem:[%s3 + $0x158] sm:$0xff]
  %v1871 = vld [vmem:[%s3 + $0x160] sm:$0xff]
  %v1872 = vld [vmem:[%s3 + $0x168] sm:$0xff]
  %v1873 = vld [vmem:[%s3 + $0x170] sm:$0xff]
  %v1874 = vld [vmem:[%s3 + $0x178] sm:$0xff]
  %v1875 = vld [vmem:[%s3 + $0x180] sm:$0xff]
  %v1876 = vld [vmem:[%s3 + $0x188] sm:$0xff]
  %v1877 = vld [vmem:[%s3 + $0x190] sm:$0xff]
  %v1878 = vld [vmem:[%s3 + $0x198] sm:$0xff]
  %v1879 = vld [vmem:[%s3 + $0x1a0] sm:$0xff]
  %v1880 = vld [vmem:[%s3 + $0x1a8] sm:$0xff]
  %v1881 = vld [vmem:[%s3 + $0x1b0] sm:$0xff]
  %v1882 = vld [vmem:[%s3 + $0x1b8] sm:$0xff]
  %v1883 = vld [vmem:[%s3 + $0x1c0] sm:$0xff]
  %v1884 = vld [vmem:[%s3 + $0x1c8] sm:$0xff]
  %v1885 = vld [vmem:[%s3 + $0x1d0] sm:$0xff]
  %v1886 = vld [vmem:[%s3 + $0x1d8] sm:$0xff]
  %v1887 = vld [vmem:[%s3 + $0x1e0] sm:$0xff]
  %v1888 = vld [vmem:[%s3 + $0x1e8] sm:$0xff]
  %v1889 = vld [vmem:[%s3 + $0x1f0] sm:$0xff]
  %v1890 = vld [vmem:[%s3 + $0x1f8] sm:$0xff]
  %v1891 = vld [vmem:[%s4] sm:$0x3]
  %v1893 = vlaneseq
  %v1894 = vshrl.u32 %v1893, 7
  %v1895 = vsub.s32 0, %v1894
  %v1896 = vrot.slane %v1891, %v1895
  %v1897 = vlaneseq
  %v1898 = vshrl.u32 %v1897, 7
  %v1899 = vsub.s32 1, %v1898
  %v1900 = vrot.slane %v1891, %v1899
  %v1967 = vunpack.c.l.b16 %v1827
  %v1968 = vunpack.c.h.b16 %v1827
  %v1969 = vunpack.c.l.b16 %v1828
  %v1970 = vunpack.c.h.b16 %v1828
  %v1971 = vunpack.c.l.b16 %v1829
  %v1972 = vunpack.c.h.b16 %v1829
  %v1973 = vunpack.c.l.b16 %v1830
  %v1974 = vunpack.c.h.b16 %v1830
  %v1975 = vunpack.c.l.b16 %v1831
  %v1976 = vunpack.c.h.b16 %v1831
  %v1977 = vunpack.c.l.b16 %v1832
  %v1978 = vunpack.c.h.b16 %v1832
  %v1979 = vunpack.c.l.b16 %v1833
  %v1980 = vunpack.c.h.b16 %v1833
  %v1981 = vunpack.c.l.b16 %v1834
  %v1982 = vunpack.c.h.b16 %v1834
  %v1983 = vunpack.c.l.b16 %v1835
  %v1984 = vunpack.c.h.b16 %v1835
  %v1985 = vunpack.c.l.b16 %v1836
  %v1986 = vunpack.c.h.b16 %v1836
  %v1987 = vunpack.c.l.b16 %v1837
  %v1988 = vunpack.c.h.b16 %v1837
  %v1989 = vunpack.c.l.b16 %v1838
  %v1990 = vunpack.c.h.b16 %v1838
  %v1991 = vunpack.c.l.b16 %v1839
  %v1992 = vunpack.c.h.b16 %v1839
  %v1993 = vunpack.c.l.b16 %v1840
  %v1994 = vunpack.c.h.b16 %v1840
  %v1995 = vunpack.c.l.b16 %v1841
  %v1996 = vunpack.c.h.b16 %v1841
  %v1997 = vunpack.c.l.b16 %v1842
  %v1998 = vunpack.c.h.b16 %v1842
  %v1999 = vunpack.c.l.b16 %v1843
  %v2000 = vunpack.c.h.b16 %v1843
  %v2001 = vunpack.c.l.b16 %v1844
  %v2002 = vunpack.c.h.b16 %v1844
  %v2003 = vunpack.c.l.b16 %v1845
  %v2004 = vunpack.c.h.b16 %v1845
  %v2005 = vunpack.c.l.b16 %v1846
  %v2006 = vunpack.c.h.b16 %v1846
  %v2007 = vunpack.c.l.b16 %v1847
  %v2008 = vunpack.c.h.b16 %v1847
  %v2009 = vunpack.c.l.b16 %v1848
  %v2010 = vunpack.c.h.b16 %v1848
  %v2011 = vunpack.c.l.b16 %v1849
  %v2012 = vunpack.c.h.b16 %v1849
  %v2013 = vunpack.c.l.b16 %v1850
  %v2014 = vunpack.c.h.b16 %v1850
  %v2015 = vunpack.c.l.b16 %v1851
  %v2016 = vunpack.c.h.b16 %v1851
  %v2017 = vunpack.c.l.b16 %v1852
  %v2018 = vunpack.c.h.b16 %v1852
  %v2019 = vunpack.c.l.b16 %v1853
  %v2020 = vunpack.c.h.b16 %v1853
  %v2021 = vunpack.c.l.b16 %v1854
  %v2022 = vunpack.c.h.b16 %v1854
  %v2023 = vunpack.c.l.b16 %v1855
  %v2024 = vunpack.c.h.b16 %v1855
  %v2025 = vunpack.c.l.b16 %v1856
  %v2026 = vunpack.c.h.b16 %v1856
  %v2027 = vunpack.c.l.b16 %v1857
  %v2028 = vunpack.c.h.b16 %v1857
  %v2029 = vunpack.c.l.b16 %v1858
  %v2030 = vunpack.c.h.b16 %v1858
  %v2031 = vunpack.c.l.b16 %v1859
  %v2032 = vunpack.c.h.b16 %v1859
  %v2033 = vunpack.c.l.b16 %v1860
  %v2034 = vunpack.c.h.b16 %v1860
  %v2035 = vunpack.c.l.b16 %v1861
  %v2036 = vunpack.c.h.b16 %v1861
  %v2037 = vunpack.c.l.b16 %v1862
  %v2038 = vunpack.c.h.b16 %v1862
  %v2039 = vunpack.c.l.b16 %v1863
  %v2040 = vunpack.c.h.b16 %v1863
  %v2041 = vunpack.c.l.b16 %v1864
  %v2042 = vunpack.c.h.b16 %v1864
  %v2043 = vunpack.c.l.b16 %v1865
  %v2044 = vunpack.c.h.b16 %v1865
  %v2045 = vunpack.c.l.b16 %v1866
  %v2046 = vunpack.c.h.b16 %v1866
  %v2047 = vunpack.c.l.b16 %v1867
  %v2048 = vunpack.c.h.b16 %v1867
  %v2049 = vunpack.c.l.b16 %v1868
  %v2050 = vunpack.c.h.b16 %v1868
  %v2051 = vunpack.c.l.b16 %v1869
  %v2052 = vunpack.c.h.b16 %v1869
  %v2053 = vunpack.c.l.b16 %v1870
  %v2054 = vunpack.c.h.b16 %v1870
  %v2055 = vunpack.c.l.b16 %v1871
  %v2056 = vunpack.c.h.b16 %v1871
  %v2057 = vunpack.c.l.b16 %v1872
  %v2058 = vunpack.c.h.b16 %v1872
  %v2059 = vunpack.c.l.b16 %v1873
  %v2060 = vunpack.c.h.b16 %v1873
  %v2061 = vunpack.c.l.b16 %v1874
  %v2062 = vunpack.c.h.b16 %v1874
  %v2063 = vunpack.c.l.b16 %v1875
  %v2064 = vunpack.c.h.b16 %v1875
  %v2065 = vunpack.c.l.b16 %v1876
  %v2066 = vunpack.c.h.b16 %v1876
  %v2067 = vunpack.c.l.b16 %v1877
  %v2068 = vunpack.c.h.b16 %v1877
  %v2069 = vunpack.c.l.b16 %v1878
  %v2070 = vunpack.c.h.b16 %v1878
  %v2071 = vunpack.c.l.b16 %v1879
  %v2072 = vunpack.c.h.b16 %v1879
  %v2073 = vunpack.c.l.b16 %v1880
  %v2074 = vunpack.c.h.b16 %v1880
  %v2075 = vunpack.c.l.b16 %v1881
  %v2076 = vunpack.c.h.b16 %v1881
  %v2077 = vunpack.c.l.b16 %v1882
  %v2078 = vunpack.c.h.b16 %v1882
  %v2079 = vunpack.c.l.b16 %v1883
  %v2080 = vunpack.c.h.b16 %v1883
  %v2081 = vunpack.c.l.b16 %v1884
  %v2082 = vunpack.c.h.b16 %v1884
  %v2083 = vunpack.c.l.b16 %v1885
  %v2084 = vunpack.c.h.b16 %v1885
  %v2085 = vunpack.c.l.b16 %v1886
  %v2086 = vunpack.c.h.b16 %v1886
  %v2087 = vunpack.c.l.b16 %v1887
  %v2088 = vunpack.c.h.b16 %v1887
  %v2089 = vunpack.c.l.b16 %v1888
  %v2090 = vunpack.c.h.b16 %v1888
  %v2091 = vunpack.c.l.b16 %v1889
  %v2092 = vunpack.c.h.b16 %v1889
  %v2093 = vunpack.c.l.b16 %v1890
  %v2094 = vunpack.c.h.b16 %v1890
  %v2095 = vpack.c.b16 %v1969, %v1967
  %v2096 = vpack.c.b16 %v1970, %v1968
  %v2097 = vpack.c.b16 %v1973, %v1971
  %v2098 = vpack.c.b16 %v1974, %v1972
  %v2099 = vpack.c.b16 %v1977, %v1975
  %v2100 = vpack.c.b16 %v1978, %v1976
  %v2101 = vpack.c.b16 %v1981, %v1979
  %v2102 = vpack.c.b16 %v1982, %v1980
  %v2103 = vpack.c.b16 %v1985, %v1983
  %v2104 = vpack.c.b16 %v1986, %v1984
  %v2105 = vpack.c.b16 %v1989, %v1987
  %v2106 = vpack.c.b16 %v1990, %v1988
  %v2107 = vpack.c.b16 %v1993, %v1991
  %v2108 = vpack.c.b16 %v1994, %v1992
  %v2109 = vpack.c.b16 %v1997, %v1995
  %v2110 = vpack.c.b16 %v1998, %v1996
  %v2111 = vpack.c.b16 %v2001, %v1999
  %v2112 = vpack.c.b16 %v2002, %v2000
  %v2113 = vpack.c.b16 %v2005, %v2003
  %v2114 = vpack.c.b16 %v2006, %v2004
  %v2115 = vpack.c.b16 %v2009, %v2007
  %v2116 = vpack.c.b16 %v2010, %v2008
  %v2117 = vpack.c.b16 %v2013, %v2011
  %v2118 = vpack.c.b16 %v2014, %v2012
  %v2119 = vpack.c.b16 %v2017, %v2015
  %v2120 = vpack.c.b16 %v2018, %v2016
  %v2121 = vpack.c.b16 %v2021, %v2019
  %v2122 = vpack.c.b16 %v2022, %v2020
  %v2123 = vpack.c.b16 %v2025, %v2023
  %v2124 = vpack.c.b16 %v2026, %v2024
  %v2125 = vpack.c.b16 %v2029, %v2027
  %v2126 = vpack.c.b16 %v2030, %v2028
  %v2127 = vpack.c.b16 %v2033, %v2031
  %v2128 = vpack.c.b16 %v2034, %v2032
  %v2129 = vpack.c.b16 %v2037, %v2035
  %v2130 = vpack.c.b16 %v2038, %v2036
  %v2131 = vpack.c.b16 %v2041, %v2039
  %v2132 = vpack.c.b16 %v2042, %v2040
  %v2133 = vpack.c.b16 %v2045, %v2043
  %v2134 = vpack.c.b16 %v2046, %v2044
  %v2135 = vpack.c.b16 %v2049, %v2047
  %v2136 = vpack.c.b16 %v2050, %v2048
  %v2137 = vpack.c.b16 %v2053, %v2051
  %v2138 = vpack.c.b16 %v2054, %v2052
  %v2139 = vpack.c.b16 %v2057, %v2055
  %v2140 = vpack.c.b16 %v2058, %v2056
  %v2141 = vpack.c.b16 %v2061, %v2059
  %v2142 = vpack.c.b16 %v2062, %v2060
  %v2143 = vpack.c.b16 %v2065, %v2063
  %v2144 = vpack.c.b16 %v2066, %v2064
  %v2145 = vpack.c.b16 %v2069, %v2067
  %v2146 = vpack.c.b16 %v2070, %v2068
  %v2147 = vpack.c.b16 %v2073, %v2071
  %v2148 = vpack.c.b16 %v2074, %v2072
  %v2149 = vpack.c.b16 %v2077, %v2075
  %v2150 = vpack.c.b16 %v2078, %v2076
  %v2151 = vpack.c.b16 %v2081, %v2079
  %v2152 = vpack.c.b16 %v2082, %v2080
  %v2153 = vpack.c.b16 %v2085, %v2083
  %v2154 = vpack.c.b16 %v2086, %v2084
  %v2155 = vpack.c.b16 %v2089, %v2087
  %v2156 = vpack.c.b16 %v2090, %v2088
  %v2157 = vpack.c.b16 %v2093, %v2091
  %v2158 = vpack.c.b16 %v2094, %v2092
  %2223 = vmatprep.subr.bf16.mxu0 %v2096
  %2224 = vmatpush1.bf16.msra.mxu0 %v2095
  %2225 = vmatprep.subr.bf16.mxu0 %v2098
  %2226 = vmatpush1.bf16.msra.mxu0 %v2097
  %2227 = vmatprep.subr.bf16.mxu0 %v2100
  %2228 = vmatpush1.bf16.msra.mxu0 %v2099
  %2229 = vmatprep.subr.bf16.mxu0 %v2102
  %2230 = vmatpush1.bf16.msra.mxu0 %v2101
  %2231 = vmatprep.subr.bf16.mxu0 %v2104
  %2232 = vmatpush1.bf16.msra.mxu0 %v2103
  %2233 = vmatprep.subr.bf16.mxu0 %v2106
  %2234 = vmatpush1.bf16.msra.mxu0 %v2105
  %2235 = vmatprep.subr.bf16.mxu0 %v2108
  %2236 = vmatpush1.bf16.msra.mxu0 %v2107
  %2237 = vmatprep.subr.bf16.mxu0 %v2110
  %2238 = vmatpush1.bf16.msra.mxu0 %v2109
  %2239 = vmatprep.subr.bf16.mxu0 %v2112
  %2240 = vmatpush1.bf16.msra.mxu0 %v2111
  %2241 = vmatprep.subr.bf16.mxu0 %v2114
  %2242 = vmatpush1.bf16.msra.mxu0 %v2113
  %2243 = vmatprep.subr.bf16.mxu0 %v2116
  %2244 = vmatpush1.bf16.msra.mxu0 %v2115
  %2245 = vmatprep.subr.bf16.mxu0 %v2118
  %2246 = vmatpush1.bf16.msra.mxu0 %v2117
  %2247 = vmatprep.subr.bf16.mxu0 %v2120
  %2248 = vmatpush1.bf16.msra.mxu0 %v2119
  %2249 = vmatprep.subr.bf16.mxu0 %v2122
  %2250 = vmatpush1.bf16.msra.mxu0 %v2121
  %2251 = vmatprep.subr.bf16.mxu0 %v2124
  %2252 = vmatpush1.bf16.msra.mxu0 %v2123
  %2253 = vmatprep.subr.bf16.mxu0 %v2126
  %2254 = vmatpush1.bf16.msra.mxu0 %v2125
  %2255 = vmatprep.mubr.bf16.mxu0 %v1800
  %2256 = vmatmul.mubr.bf16.gmra.mrb[0].mxu0 %v1799
  %v2257 = vpop.f32.mrb[0].mxu0
  %v2258 = vadd.f32 %v1896, %v2257
  %v2259 = vpop.f32.mrb[0].mxu0
  %v2260 = vadd.f32 %v1900, %v2259
  %v2261 = vpop.f32.mrb[0].mxu0
  %v2262 = vadd.f32 %v1896, %v2261
  %v2263 = vpop.f32.mrb[0].mxu0
  %v2264 = vadd.f32 %v1900, %v2263
  %2265 = vdwg.mxu0
  %2266 = vmatprep.subr.bf16.mxu0 %v2128
  %2267 = vmatpush1.bf16.msra.mxu0 %v2127
  %2268 = vmatprep.subr.bf16.mxu0 %v2130
  %2269 = vmatpush1.bf16.msra.mxu0 %v2129
  %2270 = vmatprep.subr.bf16.mxu0 %v2132
  %2271 = vmatpush1.bf16.msra.mxu0 %v2131
  %2272 = vmatprep.subr.bf16.mxu0 %v2134
  %2273 = vmatpush1.bf16.msra.mxu0 %v2133
  %2274 = vmatprep.subr.bf16.mxu0 %v2136
  %2275 = vmatpush1.bf16.msra.mxu0 %v2135
  %2276 = vmatprep.subr.bf16.mxu0 %v2138
  %2277 = vmatpush1.bf16.msra.mxu0 %v2137
  %2278 = vmatprep.subr.bf16.mxu0 %v2140
  %2279 = vmatpush1.bf16.msra.mxu0 %v2139
  %2280 = vmatprep.subr.bf16.mxu0 %v2142
  %2281 = vmatpush1.bf16.msra.mxu0 %v2141
  %2282 = vmatprep.subr.bf16.mxu0 %v2144
  %2283 = vmatpush1.bf16.msra.mxu0 %v2143
  %2284 = vmatprep.subr.bf16.mxu0 %v2146
  %2285 = vmatpush1.bf16.msra.mxu0 %v2145
  %2286 = vmatprep.subr.bf16.mxu0 %v2148
  %2287 = vmatpush1.bf16.msra.mxu0 %v2147
  %2288 = vmatprep.subr.bf16.mxu0 %v2150
  %2289 = vmatpush1.bf16.msra.mxu0 %v2149
  %2290 = vmatprep.subr.bf16.mxu0 %v2152
  %2291 = vmatpush1.bf16.msra.mxu0 %v2151
  %2292 = vmatprep.subr.bf16.mxu0 %v2154
  %2293 = vmatpush1.bf16.msra.mxu0 %v2153
  %2294 = vmatprep.subr.bf16.mxu0 %v2156
  %2295 = vmatpush1.bf16.msra.mxu0 %v2155
  %2296 = vmatprep.subr.bf16.mxu0 %v2158
  %2297 = vmatpush1.bf16.msra.mxu0 %v2157
  %2298 = vmatprep.mubr.bf16.mxu0 %v1802
  %2299 = vmatmul.mubr.bf16.gmra.mrb[0].mxu0 %v1801
  %v2300 = vpop.f32.mrb[0].mxu0
  %v2301 = vadd.f32 %v2258, %v2300
  %v2302 = vpop.f32.mrb[0].mxu0
  %v2303 = vadd.f32 %v2260, %v2302
  %v2304 = vpop.f32.mrb[0].mxu0
  %v2305 = vadd.f32 %v2262, %v2304
  %v2306 = vpop.f32.mrb[0].mxu0
  %v2307 = vadd.f32 %v2264, %v2306
  %2308 = vdwg.mxu0
  %v2309 = vmax.f32 %v2301, 0.0
  %v2310 = vmax.f32 %v2303, 0.0
  %v2311 = vmax.f32 %v2305, 0.0
  %v2312 = vmax.f32 %v2307, 0.0
  %v2313 = vpack.c.bf16 %v2311, %v2309
  %v2314 = vpack.c.bf16 %v2312, %v2310
  %v2317 = vunpack.c.l.b16 %v2313
  %v2318 = vunpack.c.l.b16 %v2314
  %v2319 = vunpack.c.h.b16 %v2313
  %v2320 = vunpack.c.h.b16 %v2314
  %v2321 = vpack.c.b16 %v2318, %v2317
  %v2322 = vpack.c.b16 %v2320, %v2319
  %2325 = vst [vmem:[%s10] sm:$0xff] %v2321
  %2326 = vst [vmem:[%s10 + $0x8] sm:$0xff] %v2322
  %v2327 = vld [vmem:[%s5] sm:$0xf]
  %v2328 = vld [vmem:[%s5 + $0x4] sm:$0xf]
  %v2329 = vld [vmem:[%s5 + $0x8] sm:$0xf]
  %v2330 = vld [vmem:[%s5 + $0xc] sm:$0xf]
  %v2331 = vld [vmem:[%s5 + $0x10] sm:$0xf]
  %v2332 = vld [vmem:[%s5 + $0x14] sm:$0xf]
  %v2333 = vld [vmem:[%s5 + $0x18] sm:$0xf]
  %v2334 = vld [vmem:[%s5 + $0x1c] sm:$0xf]
  %v2335 = vld [vmem:[%s5 + $0x20] sm:$0xf]
  %v2336 = vld [vmem:[%s5 + $0x24] sm:$0xf]
  %v2337 = vld [vmem:[%s5 + $0x28] sm:$0xf]
  %v2338 = vld [vmem:[%s5 + $0x2c] sm:$0xf]
  %v2339 = vld [vmem:[%s5 + $0x30] sm:$0xf]
  %v2340 = vld [vmem:[%s5 + $0x34] sm:$0xf]
  %v2341 = vld [vmem:[%s5 + $0x38] sm:$0xf]
  %v2342 = vld [vmem:[%s5 + $0x3c] sm:$0xf]
  %v2343 = vld [vmem:[%s5 + $0x40] sm:$0xf]
  %v2344 = vld [vmem:[%s5 + $0x44] sm:$0xf]
  %v2345 = vld [vmem:[%s5 + $0x48] sm:$0xf]
  %v2346 = vld [vmem:[%s5 + $0x4c] sm:$0xf]
  %v2347 = vld [vmem:[%s5 + $0x50] sm:$0xf]
  %v2348 = vld [vmem:[%s5 + $0x54] sm:$0xf]
  %v2349 = vld [vmem:[%s5 + $0x58] sm:$0xf]
  %v2350 = vld [vmem:[%s5 + $0x5c] sm:$0xf]
  %v2351 = vld [vmem:[%s5 + $0x60] sm:$0xf]
  %v2352 = vld [vmem:[%s5 + $0x64] sm:$0xf]
  %v2353 = vld [vmem:[%s5 + $0x68] sm:$0xf]
  %v2354 = vld [vmem:[%s5 + $0x6c] sm:$0xf]
  %v2355 = vld [vmem:[%s5 + $0x70] sm:$0xf]
  %v2356 = vld [vmem:[%s5 + $0x74] sm:$0xf]
  %v2357 = vld [vmem:[%s5 + $0x78] sm:$0xf]
  %v2358 = vld [vmem:[%s5 + $0x7c] sm:$0xf]
  %v2359 = vld [vmem:[%s6] sm:$0x1]
  %v2361 = vlaneseq
  %v2362 = vshrl.u32 %v2361, 7
  %v2363 = vsub.s32 0, %v2362
  %v2364 = vrot.slane %v2359, %v2363
  %v2398 = vunpack.c.l.b16 %v2327
  %v2399 = vunpack.c.l.b16 %v2328
  %v2400 = vunpack.c.l.b16 %v2329
  %v2401 = vunpack.c.l.b16 %v2330
  %v2402 = vunpack.c.l.b16 %v2331
  %v2403 = vunpack.c.l.b16 %v2332
  %v2404 = vunpack.c.l.b16 %v2333
  %v2405 = vunpack.c.l.b16 %v2334
  %v2406 = vunpack.c.l.b16 %v2335
  %v2407 = vunpack.c.l.b16 %v2336
  %v2408 = vunpack.c.l.b16 %v2337
  %v2409 = vunpack.c.l.b16 %v2338
  %v2410 = vunpack.c.l.b16 %v2339
  %v2411 = vunpack.c.l.b16 %v2340
  %v2412 = vunpack.c.l.b16 %v2341
  %v2413 = vunpack.c.l.b16 %v2342
  %v2414 = vunpack.c.l.b16 %v2343
  %v2415 = vunpack.c.l.b16 %v2344
  %v2416 = vunpack.c.l.b16 %v2345
  %v2417 = vunpack.c.l.b16 %v2346
  %v2418 = vunpack.c.l.b16 %v2347
  %v2419 = vunpack.c.l.b16 %v2348
  %v2420 = vunpack.c.l.b16 %v2349
  %v2421 = vunpack.c.l.b16 %v2350
  %v2422 = vunpack.c.l.b16 %v2351
  %v2423 = vunpack.c.l.b16 %v2352
  %v2424 = vunpack.c.l.b16 %v2353
  %v2425 = vunpack.c.l.b16 %v2354
  %v2426 = vunpack.c.l.b16 %v2355
  %v2427 = vunpack.c.l.b16 %v2356
  %v2428 = vunpack.c.l.b16 %v2357
  %v2429 = vunpack.c.l.b16 %v2358
  %v2430 = vpack.c.b16 %v2399, %v2398
  %v2431 = vpack.c.b16 %v2401, %v2400
  %v2432 = vpack.c.b16 %v2403, %v2402
  %v2433 = vpack.c.b16 %v2405, %v2404
  %v2434 = vpack.c.b16 %v2407, %v2406
  %v2435 = vpack.c.b16 %v2409, %v2408
  %v2436 = vpack.c.b16 %v2411, %v2410
  %v2437 = vpack.c.b16 %v2413, %v2412
  %v2438 = vpack.c.b16 %v2415, %v2414
  %v2439 = vpack.c.b16 %v2417, %v2416
  %v2440 = vpack.c.b16 %v2419, %v2418
  %v2441 = vpack.c.b16 %v2421, %v2420
  %v2442 = vpack.c.b16 %v2423, %v2422
  %v2443 = vpack.c.b16 %v2425, %v2424
  %v2444 = vpack.c.b16 %v2427, %v2426
  %v2445 = vpack.c.b16 %v2429, %v2428
  %2462 = vmatprep.subr.bf16.mxu0 0
  %2463 = vmatpush1.bf16.msra.mxu0 %v2430
  %2464 = vmatprep.subr.bf16.mxu0 0
  %2465 = vmatpush1.bf16.msra.mxu0 %v2431
  %2466 = vmatprep.subr.bf16.mxu0 0
  %2467 = vmatpush1.bf16.msra.mxu0 %v2432
  %2468 = vmatprep.subr.bf16.mxu0 0
  %2469 = vmatpush1.bf16.msra.mxu0 %v2433
  %2470 = vmatprep.subr.bf16.mxu0 0
  %2471 = vmatpush1.bf16.msra.mxu0 %v2434
  %2472 = vmatprep.subr.bf16.mxu0 0
  %2473 = vmatpush1.bf16.msra.mxu0 %v2435
  %2474 = vmatprep.subr.bf16.mxu0 0
  %2475 = vmatpush1.bf16.msra.mxu0 %v2436
  %2476 = vmatprep.subr.bf16.mxu0 0
  %2477 = vmatpush1.bf16.msra.mxu0 %v2437
  %2478 = vmatprep.subr.bf16.mxu0 0
  %2479 = vmatpush1.bf16.msra.mxu0 %v2438
  %2480 = vmatprep.subr.bf16.mxu0 0
  %2481 = vmatpush1.bf16.msra.mxu0 %v2439
  %2482 = vmatprep.subr.bf16.mxu0 0
  %2483 = vmatpush1.bf16.msra.mxu0 %v2440
  %2484 = vmatprep.subr.bf16.mxu0 0
  %2485 = vmatpush1.bf16.msra.mxu0 %v2441
  %2486 = vmatprep.subr.bf16.mxu0 0
  %2487 = vmatpush1.bf16.msra.mxu0 %v2442
  %2488 = vmatprep.subr.bf16.mxu0 0
  %2489 = vmatpush1.bf16.msra.mxu0 %v2443
  %2490 = vmatprep.subr.bf16.mxu0 0
  %2491 = vmatpush1.bf16.msra.mxu0 %v2444
  %2492 = vmatprep.subr.bf16.mxu0 0
  %2493 = vmatpush1.bf16.msra.mxu0 %v2445
  %2494 = vmatprep.mubr.bf16.mxu0 %v2314
  %2495 = vmatmul.mubr.bf16.gmra.mrb[0].mxu0 %v2313
  %v2496 = vpop.f32.mrb[0].mxu0
  %v2497 = vadd.f32 %v2364, %v2496
  %v2498 = vpop.f32.mrb[0].mxu0
  %v2499 = vpop.f32.mrb[0].mxu0
  %v2500 = vadd.f32 %v2364, %v2499
  %v2501 = vpop.f32.mrb[0].mxu0
  %2502 = vdwg.mxu0
  %v2503 = vmax.f32 %v2497, 0.0
  %v2504 = vmax.f32 %v2500, 0.0
  %v2505 = vpack.c.bf16 %v2504, %v2503
  %v2507 = vunpack.c.l.b16 %v2505
  %v2508 = vunpack.c.h.b16 %v2505
  %v2509 = vpack.c.b16 %v2507, %v2507
  %v2510 = vpack.c.b16 %v2508, %v2508
  %2513 = vst [vmem:[%s11] sm:$0xf] %v2509
  %2514 = vst [vmem:[%s11 + $0x4] sm:$0xf] %v2510
  %v2515 = vld [vmem:[%s7] sm:$0xf]
  %v2516 = vld [vmem:[%s7 + $0x4] sm:$0xf]
  %v2517 = vld [vmem:[%s7 + $0x8] sm:$0xf]
  %v2518 = vld [vmem:[%s7 + $0xc] sm:$0xf]
  %v2519 = vld [vmem:[%s7 + $0x10] sm:$0xf]
  %v2520 = vld [vmem:[%s7 + $0x14] sm:$0xf]
  %v2521 = vld [vmem:[%s7 + $0x18] sm:$0xf]
  %v2522 = vld [vmem:[%s7 + $0x1c] sm:$0xf]
  %v2523 = vld [vmem:[%s7 + $0x20] sm:$0xf]
  %v2524 = vld [vmem:[%s7 + $0x24] sm:$0xf]
  %v2525 = vld [vmem:[%s7 + $0x28] sm:$0xf]
  %v2526 = vld [vmem:[%s7 + $0x2c] sm:$0xf]
  %v2527 = vld [vmem:[%s7 + $0x30] sm:$0xf]
  %v2528 = vld [vmem:[%s7 + $0x34] sm:$0xf]
  %v2529 = vld [vmem:[%s7 + $0x38] sm:$0xf]
  %v2530 = vld [vmem:[%s7 + $0x3c] sm:$0xf]
  %v2531 = vld [vmem:[%s8] sm:$0x1]
  %v2533 = vlaneseq
  %v2534 = vshrl.u32 %v2533, 7
  %v2535 = vsub.s32 0, %v2534
  %v2536 = vrot.slane %v2531, %v2535
  %v2554 = vunpack.c.l.b16 %v2515
  %v2555 = vunpack.c.l.b16 %v2516
  %v2556 = vunpack.c.l.b16 %v2517
  %v2557 = vunpack.c.l.b16 %v2518
  %v2558 = vunpack.c.l.b16 %v2519
  %v2559 = vunpack.c.l.b16 %v2520
  %v2560 = vunpack.c.l.b16 %v2521
  %v2561 = vunpack.c.l.b16 %v2522
  %v2562 = vunpack.c.l.b16 %v2523
  %v2563 = vunpack.c.l.b16 %v2524
  %v2564 = vunpack.c.l.b16 %v2525
  %v2565 = vunpack.c.l.b16 %v2526
  %v2566 = vunpack.c.l.b16 %v2527
  %v2567 = vunpack.c.l.b16 %v2528
  %v2568 = vunpack.c.l.b16 %v2529
  %v2569 = vunpack.c.l.b16 %v2530
  %v2570 = vpack.c.b16 %v2555, %v2554
  %v2571 = vpack.c.b16 %v2557, %v2556
  %v2572 = vpack.c.b16 %v2559, %v2558
  %v2573 = vpack.c.b16 %v2561, %v2560
  %v2574 = vpack.c.b16 %v2563, %v2562
  %v2575 = vpack.c.b16 %v2565, %v2564
  %v2576 = vpack.c.b16 %v2567, %v2566
  %v2577 = vpack.c.b16 %v2569, %v2568
  %2586 = vmatprep.subr.bf16.mxu0 0
  %2587 = vmatpush1.bf16.msra.mxu0 %v2570
  %2588 = vmatprep.subr.bf16.mxu0 0
  %2589 = vmatpush1.bf16.msra.mxu0 %v2571
  %2590 = vmatprep.subr.bf16.mxu0 0
  %2591 = vmatpush1.bf16.msra.mxu0 %v2572
  %2592 = vmatprep.subr.bf16.mxu0 0
  %2593 = vmatpush1.bf16.msra.mxu0 %v2573
  %2594 = vmatprep.subr.bf16.mxu0 0
  %2595 = vmatpush1.bf16.msra.mxu0 %v2574
  %2596 = vmatprep.subr.bf16.mxu0 0
  %2597 = vmatpush1.bf16.msra.mxu0 %v2575
  %2598 = vmatprep.subr.bf16.mxu0 0
  %2599 = vmatpush1.bf16.msra.mxu0 %v2576
  %2600 = vmatprep.subr.bf16.mxu0 0
  %2601 = vmatpush1.bf16.msra.mxu0 %v2577
  %2602 = vmatprep.subr.bf16.mxu0 0
  %2603 = vmatpush1.bf16.msra.mxu0 0
  %2604 = vmatprep.subr.bf16.mxu0 0
  %2605 = vmatpush1.bf16.msra.mxu0 0
  %2606 = vmatprep.subr.bf16.mxu0 0
  %2607 = vmatpush1.bf16.msra.mxu0 0
  %2608 = vmatprep.subr.bf16.mxu0 0
  %2609 = vmatpush1.bf16.msra.mxu0 0
  %2610 = vmatprep.subr.bf16.mxu0 0
  %2611 = vmatpush1.bf16.msra.mxu0 0
  %2612 = vmatprep.subr.bf16.mxu0 0
  %2613 = vmatpush1.bf16.msra.mxu0 0
  %2614 = vmatprep.subr.bf16.mxu0 0
  %2615 = vmatpush1.bf16.msra.mxu0 0
  %2616 = vmatprep.subr.bf16.mxu0 0
  %2617 = vmatpush1.bf16.msra.mxu0 0
  %2618 = vmatprep.mubr.bf16.mxu0 0
  %2619 = vmatmul.mubr.bf16.gmra.mrb[0].mxu0 %v2505
  %v2620 = vpop.f32.mrb[0].mxu0
  %v2621 = vadd.f32 %v2536, %v2620
  %v2622 = vpop.f32.mrb[0].mxu0
  %v2623 = vpop.f32.mrb[0].mxu0
  %v2624 = vadd.f32 %v2536, %v2623
  %v2625 = vpop.f32.mrb[0].mxu0
  %2626 = vdwg.mxu0
  %2627 = vst [vmem:[%s12] sm:$0xff] %v2621
  %2628 = vst [vmem:[%s12 + $0x8] sm:$0xff] %v2624
  // Predicated region
  $region38: #{simplenet_forward.1} parent=0 // pred_check
    _
  $region39: #{simplenet_forward.1} parent=0 // pred_check_branch
    %2630 = sbr.rel (0) target = $region41
  $region40: #{simplenet_forward.1} parent=0 // pred_region
    _
  $region41: #{simplenet_forward.1} parent=0 // pred_fallthru
    _
  // Predicated region
  $region42: #{simplenet_forward.1} parent=0 // pred_check
    _
  $region43: #{simplenet_forward.1} parent=0 // pred_check_branch
    %2632 = sbr.rel (0) target = $region45
  $region44: #{simplenet_forward.1} parent=0 // pred_region
    _
  $region45: #{simplenet_forward.1} parent=0 // pred_fallthru
    _
  // Predicated region
  $region46: #{simplenet_forward.1} parent=0 // pred_check
    _
  $region47: #{simplenet_forward.1} parent=0 // pred_check_branch
    %2634 = sbr.rel (0) target = $region49
  $region48: #{simplenet_forward.1} parent=0 // pred_region
    _
  $region49: #{simplenet_forward.1} parent=0 // pred_fallthru
    _
  // Predicated region
  $region50: #{simplenet_forward.1} parent=0 // pred_check
    _
  $region51: #{simplenet_forward.1} parent=0 // pred_check_branch
    %2636 = sbr.rel (0) target = $region53
  $region52: #{simplenet_forward.1} parent=0 // pred_region
    _
  $region53: #{simplenet_forward.1} parent=0 // pred_fallthru
    _
  // Predicated region
  $region54: #{simplenet_forward.1} parent=0 // pred_check
    _
  $region55: #{simplenet_forward.1} parent=0 // pred_check_branch
    %2638 = sbr.rel (0) target = $region57
  $region56: #{simplenet_forward.1} parent=0 // pred_region
    _
  $region57: #{simplenet_forward.1} parent=0 // pred_fallthru
    _
  // Predicated region
  $region58: #{simplenet_forward.1} parent=0 // pred_check
    _
  $region59: #{simplenet_forward.1} parent=0 // pred_check_branch
    %2640 = sbr.rel (0) target = $region61
  $region60: #{simplenet_forward.1} parent=0 // pred_region
    _
  $region61: #{simplenet_forward.1} parent=0 // pred_fallthru
    _
  // Predicated region
  $region62: #{simplenet_forward.1} parent=0 // pred_check
    _
  $region63: #{simplenet_forward.1} parent=0 // pred_check_branch
    %2642 = sbr.rel (0) target = $region65
  $region64: #{simplenet_forward.1} parent=0 // pred_region
    _
  $region65: #{simplenet_forward.1} parent=0 // pred_fallthru
    _
  // Predicated region
  $region66: #{simplenet_forward.1} parent=0 // pred_check
    _
  $region67: #{simplenet_forward.1} parent=0 // pred_check_branch
    %2644 = sbr.rel (0) target = $region69
  $region68: #{simplenet_forward.1} parent=0 // pred_region
    _
  $region69: #{simplenet_forward.1} parent=0 // pred_fallthru
    _

</llo_original>
